<compile_context>
chip_gen: v7x
topology: tpu7x:2x2x1
jax: 0.10.0
libtpu: 0.0.40
codegen_flags: <defaults>
</compile_context>

<pallas_src>
import jax
import jax.numpy as jnp
import numpy as np
from jax.experimental import pallas as pl
from jax.experimental.pallas import tpu as pltpu

LANE = 128  # lane width of a TPU vreg


# ----------------------------------------------------------------------------
# Fused Pallas kernel
# ----------------------------------------------------------------------------
def fused_sage_kernel(mask_tile_ref, feat_ref, invd_ref,
                      sel_ref, maskb_ref, invdb_ref,
                      w1_ref, w2_ref, wcls_ref,
                      out_ref, h1_ref):
    """Fused 2-layer GraphSAGE encoder + linear classifier.

    Grid: one axis over layer-1 node-row tiles ("arbitrary").
      mask_tile : (T, N)     bf16 un-normalized 0/1 neighbor mask, row tile
      feat      : (N, FP)    bf16 node features (lane-padded), VMEM resident
      invd      : (N, 1)     f32  1/deg per node (layer 1)
      sel       : (B, N)     bf16 one-hot rows selecting the batch nodes
      maskb     : (B, N)     bf16 un-normalized 0/1 neighbor mask of the batch
      invdb     : (B, 1)     f32  1/deg per batch node (layer 2)
      w1        : (2*FP, HP) bf16 stacked [W1_self.T ; W1_neigh.T]   (K = 256)
      w2        : (2*HP, HP) bf16 stacked [W2_self.T ; W2_neigh.T]   (K = 256)
      wcls      : (HP, CP)   bf16 classifier weight (transposed, padded)
      out       : (B, CP)    f32  scores; logical classes live in out[:, :C]
      h1        : (N, HP)    bf16 VMEM scratch, persists across grid steps
    """
    f32, bf16 = jnp.float32, jnp.bfloat16
    i = pl.program_id(0)
    tile_n = mask_tile_ref.shape[0]
    row0 = pl.multiple_of(i * tile_n, tile_n)

    # ---- layer 1 for this node-row tile; result stays in VMEM scratch ----
    feat = feat_ref[...]                                               # (N, FP)
    neigh1 = jnp.dot(mask_tile_ref[...], feat, preferred_element_type=f32)
    neigh1 = neigh1 * invd_ref[pl.ds(row0, tile_n), :]                 # exact f32 mean
    self1 = feat_ref[pl.ds(row0, tile_n), :]                           # (T, FP) bf16
    x1 = jnp.concatenate([self1, neigh1.astype(bf16)], axis=-1)        # (T, 2*FP)
    h1 = jnp.dot(x1, w1_ref[...], preferred_element_type=f32)          # single K=256 matmul
    h1_ref[pl.ds(row0, tile_n), :] = jnp.maximum(h1, 0.0).astype(bf16)

    # ---- layer 2 + classifier epilogue on the last grid step ----
    @pl.when(i == pl.num_programs(0) - 1)
    def _():
        h1_all = h1_ref[...]                                           # (N, HP)
        self2 = jnp.dot(sel_ref[...], h1_all, preferred_element_type=f32)
        neigh2 = jnp.dot(maskb_ref[...], h1_all, preferred_element_type=f32)
        neigh2 = neigh2 * invdb_ref[...]
        x2 = jnp.concatenate([self2.astype(bf16), neigh2.astype(bf16)],
                             axis=-1)                                  # (B, 2*HP) -> K=256
        h2 = jnp.maximum(jnp.dot(x2, w2_ref[...], preferred_element_type=f32),
                         0.0).astype(bf16)
        out_ref[...] = jnp.dot(h2, wcls_ref[...], preferred_element_type=f32)


def supervised_graphsage_forward(mask_full, feat, inv_deg_full, sel,
                                 mask_batch, inv_deg_batch,
                                 w1_stacked, w2_stacked, wcls,
                                 num_classes, *, tile_n=128):
    """Single fused pallas_call, gridded over layer-1 node-row tiles."""
    n_nodes, fp = feat.shape
    b = sel.shape[0]
    hp = w1_stacked.shape[1]
    cp = wcls.shape[1]
    tile_n = min(tile_n, n_nodes)
    assert n_nodes % tile_n == 0 and tile_n % 8 == 0
    grid = (n_nodes // tile_n,)
    const = lambda i: (0, 0)

    flops = 2 * (n_nodes * n_nodes * fp          # layer-1 neighbor aggregate
                 + n_nodes * (2 * fp) * hp       # layer-1 fused matmul (K=2*FP)
                 + 2 * b * n_nodes * hp          # batch select + layer-2 aggregate
                 + b * (2 * hp) * hp             # layer-2 fused matmul (K=2*HP)
                 + b * hp * cp)                  # classifier
    bytes_accessed = sum(int(np.prod(a.shape)) * a.dtype.itemsize
                         for a in (mask_full, feat, inv_deg_full, sel, mask_batch,
                                   inv_deg_batch, w1_stacked, w2_stacked, wcls))
    bytes_accessed += b * cp * 4

    out = pl.pallas_call(
        fused_sage_kernel,
        out_shape=jax.ShapeDtypeStruct((b, cp), jnp.float32),
        grid_spec=pltpu.PrefetchScalarGridSpec(
            num_scalar_prefetch=0,
            grid=grid,
            in_specs=[
                pl.BlockSpec((tile_n, n_nodes), lambda i: (i, 0)),  # mask_full row tile
                pl.BlockSpec((n_nodes, fp), const),                 # features (resident)
                pl.BlockSpec((n_nodes, 1), const),                  # 1/deg (layer 1)
                pl.BlockSpec((b, n_nodes), const),                  # batch one-hot select
                pl.BlockSpec((b, n_nodes), const),                  # batch neighbor mask
                pl.BlockSpec((b, 1), const),                        # 1/deg (layer 2)
                pl.BlockSpec((2 * fp, hp), const),                  # W1 stacked (K=256)
                pl.BlockSpec((2 * hp, hp), const),                  # W2 stacked (K=256)
                pl.BlockSpec((hp, cp), const),                      # W_cls
            ],
            out_specs=pl.BlockSpec((b, cp), const),
            scratch_shapes=[pltpu.VMEM((n_nodes, hp), jnp.bfloat16)],
        ),
        compiler_params=pltpu.CompilerParams(
            # Row axis must be "arbitrary": the last-step epilogue reads every
            # h1 tile written by earlier steps (see TODO at top re: v7x megacore).
            dimension_semantics=("arbitrary",),
            # Above the 16 MiB (v5e) / 32 MiB (v6e,v7x) scoped defaults, with
            # headroom under v7x's 64 MiB-per-TC physical VMEM.
            vmem_limit_bytes=48 * 1024 * 1024,
        ),
        cost_estimate=pl.CostEstimate(flops=flops, transcendentals=0,
                                      bytes_accessed=bytes_accessed),
    )(mask_full, feat, inv_deg_full, sel, mask_batch, inv_deg_batch,
      w1_stacked, w2_stacked, wcls)
    # Slice off the lane padding so callers never see the padded class columns.
    return out[:, :num_classes]


# ----------------------------------------------------------------------------
# Host-side helpers
# ----------------------------------------------------------------------------
def xavier_uniform(key, shape):
    fan_out, fan_in = shape
    bound = float(np.sqrt(6.0 / (fan_in + fan_out)))
    return jax.random.uniform(key, shape, jnp.float32, -bound, bound)


def build_neighbor_mask(neigh_idx, num_nodes):
    """(rows, k) neighbor ids -> un-normalized 0/1 mask (rows, num_nodes), exact in
    bf16, plus an f32 reciprocal-degree column (matches MeanAggregator's set
    semantics via np.unique)."""
    rows = neigh_idx.shape[0]
    mask = np.zeros((rows, num_nodes), dtype=np.float32)
    inv_deg = np.zeros((rows, 1), dtype=np.float32)
    for r in range(rows):
        cols = np.unique(neigh_idx[r])
        mask[r, cols] = 1.0
        inv_deg[r, 0] = 1.0 / float(len(cols))
    return mask, inv_deg


def pad2(x, shape):
    """Zero-pad a 2-D array up to `shape` (lane-dense 128-multiples)."""
    out = jnp.zeros(shape, jnp.float32)
    return out.at[: x.shape[0], : x.shape[1]].set(x)


def stack_halves(w, in_dim, in_pad, out_pad):
    """Reference weight (hidden, 2*in_dim) -> stacked transposed weight
    (2*in_pad, out_pad) so that concat([self, neigh], -1) @ stacked
    == self @ W_self.T + neigh @ W_neigh.T (concat-K fusion)."""
    hidden = w.shape[0]
    out = jnp.zeros((2 * in_pad, out_pad), jnp.float32)
    out = out.at[:in_dim, :hidden].set(w[:, :in_dim].T)
    out = out.at[in_pad:in_pad + in_dim, :hidden].set(w[:, in_dim:].T)
    return out


# ----------------------------------------------------------------------------
# Demo / correctness check
# ----------------------------------------------------------------------------
if __name__ == "__main__":
    N_NODES, N_FEATS, HIDDEN, N_CLASSES = 256, 16, 64, 8
    BATCH, NUM_SAMPLES, TILE_N = 16, 5, 128
    FP, HP, CP = LANE, LANE, LANE   # feature / hidden / class dims padded to 128

    key = jax.random.PRNGKey(0)
    k_feat, k_w1, k_w2, k_wc = jax.random.split(key, 4)

    # Node features (frozen nn.Embedding weight in the reference), lane-padded.
    feat_data = jax.random.normal(k_feat, (N_NODES, N_FEATS), jnp.float32)
    feat_pad = pad2(feat_data, (N_NODES, FP))

    # TODO(synk): the reference samples neighbors with python random.sample; no
    # Pallas equivalent, replaced by a deterministic 5-neighbor ring table.
    offsets = np.array([1, 2, 3, -1, -2])[:NUM_SAMPLES]
    neigh_full = (np.arange(N_NODES)[:, None] + offsets[None, :]) % N_NODES
    mask_full, inv_deg_full = build_neighbor_mask(neigh_full, N_NODES)    # (N,N),(N,1)

    batch_nodes = np.arange(0, N_NODES, N_NODES // BATCH, dtype=np.int32)  # spread out
    mask_batch, inv_deg_batch = build_neighbor_mask(neigh_full[batch_nodes], N_NODES)
    sel = np.zeros((BATCH, N_NODES), dtype=np.float32)                     # one-hot
    sel[np.arange(BATCH), batch_nodes] = 1.0                               # gather rows

    # Encoder weights are (hidden, 2*in_dim) in the reference; stack the two
    # transposed halves host-side so each layer is one K=256 matmul.
    w1 = xavier_uniform(k_w1, (HIDDEN, 2 * N_FEATS))
    w2 = xavier_uniform(k_w2, (HIDDEN, 2 * HIDDEN))
    wc = xavier_uniform(k_wc, (N_CLASSES, HIDDEN))
    w1_stacked = stack_halves(w1, N_FEATS, FP, HP)     # (2*FP, HP)
    w2_stacked = stack_halves(w2, HIDDEN, HP, HP)      # (2*HP, HP)
    wcls_pad = pad2(wc.T, (HP, CP))                    # (HP, CP)

    # bf16 MXU operands, f32 degree reciprocals; accumulation stays f32 in-kernel.
    bf = lambda a: jnp.asarray(a, jnp.bfloat16)
    fp32 = lambda a: jnp.asarray(a, jnp.float32)
    args = (bf(mask_full), bf(feat_pad), fp32(inv_deg_full),
            bf(sel), bf(mask_batch), fp32(inv_deg_batch),
            bf(w1_stacked), bf(w2_stacked), bf(wcls_pad))

    scores = jax.block_until_ready(
        supervised_graphsage_forward(*args, N_CLASSES, tile_n=TILE_N))
    assert scores.shape == (BATCH, N_CLASSES)

    # --- reference 1: pure JAX with the identical bf16/f32 dtype flow ---
    mf, ftp, idf, sl, mb, idb, a1, a2, ac = args
    f32, bf16 = jnp.float32, jnp.bfloat16
    n1 = jnp.dot(mf, ftp, preferred_element_type=f32) * idf
    x1 = jnp.concatenate([ftp, n1.astype(bf16)], axis=-1)
    h1 = jnp.maximum(jnp.dot(x1, a1, preferred_element_type=f32), 0.0).astype(bf16)
    s2 = jnp.dot(sl, h1, preferred_element_type=f32)
    n2 = jnp.dot(mb, h1, preferred_element_type=f32) * idb
    x2 = jnp.concatenate([s2.astype(bf16), n2.astype(bf16)], axis=-1)
    h2 = jnp.maximum(jnp.dot(x2, a2, preferred_element_type=f32), 0.0).astype(bf16)
    ref_bf = jnp.dot(h2, ac, preferred_element_type=f32)[:, :N_CLASSES]
    np.testing.assert_allclose(np.asarray(scores), np.asarray(ref_bf),
                               rtol=2e-2, atol=2e-2)

    # --- reference 2: full-f32 semantics of the original module (loose) ---
    mfn = jnp.asarray(mask_full) * jnp.asarray(inv_deg_full)
    mbn = jnp.asarray(mask_batch) * jnp.asarray(inv_deg_batch)
    n1f = mfn @ feat_pad
    h1f = jnp.maximum(jnp.concatenate([feat_pad, n1f], axis=-1) @ w1_stacked, 0.0)
    n2f = mbn @ h1f
    h2f = jnp.maximum(jnp.concatenate([h1f[batch_nodes], n2f], axis=-1) @ w2_stacked, 0.0)
    ref_f32 = (h2f @ wcls_pad)[:, :N_CLASSES]
    np.testing.assert_allclose(np.asarray(scores), np.asarray(ref_f32),
                               rtol=1e-1, atol=1e-1)

    print("KERNEL_OK")
</pallas_src>

<mosaic_0001>
module attributes {stable_mosaic.version = 11 : i64} {
  func.func @fused_sage_kernel(%arg0: i32, %arg1: memref<128x256xbf16, #tpu.memory_space<vmem>>, %arg2: memref<256x128xbf16, #tpu.memory_space<vmem>>, %arg3: memref<256x1xf32, #tpu.memory_space<vmem>>, %arg4: memref<16x256xbf16, #tpu.memory_space<vmem>>, %arg5: memref<16x256xbf16, #tpu.memory_space<vmem>>, %arg6: memref<16x1xf32, #tpu.memory_space<vmem>>, %arg7: memref<256x128xbf16, #tpu.memory_space<vmem>>, %arg8: memref<256x128xbf16, #tpu.memory_space<vmem>>, %arg9: memref<128x128xbf16, #tpu.memory_space<vmem>>, %arg10: memref<16x128xf32, #tpu.memory_space<vmem>>, %arg11: memref<256x128xbf16, #tpu.memory_space<vmem>>) attributes {dimension_semantics = [#tpu.dimension_semantics<arbitrary>], iteration_bounds = array<i64: 2>, scalar_prefetch = 0 : i64, scratch_operands = 1 : i64, tpu.core_type = #tpu.core_type<tc>, window_params = [{transform_indices = @transform_0, window_bounds = array<i64: 128, 256>}, {pipeline_mode = #tpu.pipeline_mode<synchronous>, transform_indices = @transform_1, window_bounds = array<i64: 256, 128>}, {pipeline_mode = #tpu.pipeline_mode<synchronous>, transform_indices = @transform_2, window_bounds = array<i64: 256, 1>}, {pipeline_mode = #tpu.pipeline_mode<synchronous>, transform_indices = @transform_3, window_bounds = array<i64: 16, 256>}, {pipeline_mode = #tpu.pipeline_mode<synchronous>, transform_indices = @transform_4, window_bounds = array<i64: 16, 256>}, {pipeline_mode = #tpu.pipeline_mode<synchronous>, transform_indices = @transform_5, window_bounds = array<i64: 16, 1>}, {pipeline_mode = #tpu.pipeline_mode<synchronous>, transform_indices = @transform_6, window_bounds = array<i64: 256, 128>}, {pipeline_mode = #tpu.pipeline_mode<synchronous>, transform_indices = @transform_7, window_bounds = array<i64: 256, 128>}, {pipeline_mode = #tpu.pipeline_mode<synchronous>, transform_indices = @transform_8, window_bounds = array<i64: 128, 128>}, {pipeline_mode = #tpu.pipeline_mode<synchronous>, transform_indices = @transform_9, window_bounds = array<i64: 16, 128>}]} {
    %c128_i32 = arith.constant 128 : i32
    %0 = arith.muli %arg0, %c128_i32 : i32
    %1 = tpu.assume_multiple %0, 128 : i32
    %c0 = arith.constant 0 : index
    %c0_0 = arith.constant 0 : index
    %2 = vector.load %arg2[%c0, %c0_0] : memref<256x128xbf16, #tpu.memory_space<vmem>>, vector<256x128xbf16>
    %c0_1 = arith.constant 0 : index
    %c0_2 = arith.constant 0 : index
    %3 = vector.load %arg1[%c0_1, %c0_2] : memref<128x256xbf16, #tpu.memory_space<vmem>>, vector<128x256xbf16>
    %cst = arith.constant dense<0.000000e+00> : vector<128x128xf32>
    %4 = tpu.matmul %3, %2, %cst {dimension_numbers = #tpu.dot_dimension_numbers<[1], [0], [0], [1], [0, 0, 1, 1], [], []>} : vector<128x256xbf16>, vector<256x128xbf16>, vector<128x128xf32> -> vector<128x128xf32>
    %5 = arith.index_cast %1 : i32 to index
    %c0_3 = arith.constant 0 : index
    %6 = vector.load %arg3[%5, %c0_3] : memref<256x1xf32, #tpu.memory_space<vmem>>, vector<128x1xf32>
    %7 = vector.broadcast %6 : vector<128x1xf32> to vector<128x128xf32>
    %8 = arith.mulf %4, %7 : vector<128x128xf32>
    %9 = arith.index_cast %1 : i32 to index
    %c0_4 = arith.constant 0 : index
    %10 = vector.load %arg2[%9, %c0_4] : memref<256x128xbf16, #tpu.memory_space<vmem>>, vector<128x128xbf16>
    %11 = arith.truncf %8 : vector<128x128xf32> to vector<128x128xbf16>
    %12 = tpu.concatenate %10, %11 in 1 : vector<128x128xbf16>, vector<128x128xbf16> -> vector<128x256xbf16>
    %c0_5 = arith.constant 0 : index
    %c0_6 = arith.constant 0 : index
    %13 = vector.load %arg7[%c0_5, %c0_6] : memref<256x128xbf16, #tpu.memory_space<vmem>>, vector<256x128xbf16>
    %cst_7 = arith.constant dense<0.000000e+00> : vector<128x128xf32>
    %14 = tpu.matmul %12, %13, %cst_7 {dimension_numbers = #tpu.dot_dimension_numbers<[1], [0], [0], [1], [0, 0, 1, 1], [], []>} : vector<128x256xbf16>, vector<256x128xbf16>, vector<128x128xf32> -> vector<128x128xf32>
    %cst_8 = arith.constant 0.000000e+00 : f32
    %15 = vector.broadcast %cst_8 : f32 to vector<128x128xf32>
    %16 = arith.maximumf %14, %15 : vector<128x128xf32>
    %17 = arith.truncf %16 : vector<128x128xf32> to vector<128x128xbf16>
    %18 = arith.index_cast %1 : i32 to index
    %c0_9 = arith.constant 0 : index
    %19 = vector.load %arg11[%18, %c0_9] : memref<256x128xbf16, #tpu.memory_space<vmem>>, vector<128x128xbf16>
    tpu.vector_store %arg11[%18, %c0_9], %17 {strides = array<i32>} : memref<256x128xbf16, #tpu.memory_space<vmem>>, vector<128x128xbf16>,
    %c1_i32 = arith.constant 1 : i32
    %20 = arith.cmpi eq, %arg0, %c1_i32 : i32
    %21 = arith.extui %20 : i1 to i32
    %c0_i32 = arith.constant 0 : i32
    %22 = arith.cmpi ne, %21, %c0_i32 : i32
    scf.if %22 {
      %c0_10 = arith.constant 0 : index
      %c0_11 = arith.constant 0 : index
      %23 = vector.load %arg11[%c0_10, %c0_11] : memref<256x128xbf16, #tpu.memory_space<vmem>>, vector<256x128xbf16>
      %c0_12 = arith.constant 0 : index
      %c0_13 = arith.constant 0 : index
      %24 = vector.load %arg4[%c0_12, %c0_13] : memref<16x256xbf16, #tpu.memory_space<vmem>>, vector<16x256xbf16>
      %cst_14 = arith.constant dense<0.000000e+00> : vector<16x128xf32>
      %25 = tpu.matmul %24, %23, %cst_14 {dimension_numbers = #tpu.dot_dimension_numbers<[1], [0], [0], [1], [0, 0, 1, 1], [], []>} : vector<16x256xbf16>, vector<256x128xbf16>, vector<16x128xf32> -> vector<16x128xf32>
      %c0_15 = arith.constant 0 : index
      %c0_16 = arith.constant 0 : index
      %26 = vector.load %arg5[%c0_15, %c0_16] : memref<16x256xbf16, #tpu.memory_space<vmem>>, vector<16x256xbf16>
      %cst_17 = arith.constant dense<0.000000e+00> : vector<16x128xf32>
      %27 = tpu.matmul %26, %23, %cst_17 {dimension_numbers = #tpu.dot_dimension_numbers<[1], [0], [0], [1], [0, 0, 1, 1], [], []>} : vector<16x256xbf16>, vector<256x128xbf16>, vector<16x128xf32> -> vector<16x128xf32>
      %c0_18 = arith.constant 0 : index
      %c0_19 = arith.constant 0 : index
      %28 = vector.load %arg6[%c0_18, %c0_19] : memref<16x1xf32, #tpu.memory_space<vmem>>, vector<16x1xf32>
      %29 = vector.broadcast %28 : vector<16x1xf32> to vector<16x128xf32>
      %30 = arith.mulf %27, %29 : vector<16x128xf32>
      %31 = arith.truncf %25 : vector<16x128xf32> to vector<16x128xbf16>
      %32 = arith.truncf %30 : vector<16x128xf32> to vector<16x128xbf16>
      %33 = tpu.concatenate %31, %32 in 1 : vector<16x128xbf16>, vector<16x128xbf16> -> vector<16x256xbf16>
      %c0_20 = arith.constant 0 : index
      %c0_21 = arith.constant 0 : index
      %34 = vector.load %arg8[%c0_20, %c0_21] : memref<256x128xbf16, #tpu.memory_space<vmem>>, vector<256x128xbf16>
      %cst_22 = arith.constant dense<0.000000e+00> : vector<16x128xf32>
      %35 = tpu.matmul %33, %34, %cst_22 {dimension_numbers = #tpu.dot_dimension_numbers<[1], [0], [0], [1], [0, 0, 1, 1], [], []>} : vector<16x256xbf16>, vector<256x128xbf16>, vector<16x128xf32> -> vector<16x128xf32>
      %cst_23 = arith.constant 0.000000e+00 : f32
      %36 = vector.broadcast %cst_23 : f32 to vector<16x128xf32>
      %37 = arith.maximumf %35, %36 : vector<16x128xf32>
      %38 = arith.truncf %37 : vector<16x128xf32> to vector<16x128xbf16>
      %c0_24 = arith.constant 0 : index
      %c0_25 = arith.constant 0 : index
      %39 = vector.load %arg9[%c0_24, %c0_25] : memref<128x128xbf16, #tpu.memory_space<vmem>>, vector<128x128xbf16>
      %cst_26 = arith.constant dense<0.000000e+00> : vector<16x128xf32>
      %40 = tpu.matmul %38, %39, %cst_26 {dimension_numbers = #tpu.dot_dimension_numbers<[1], [0], [0], [1], [0, 0, 1, 1], [], []>} : vector<16x128xbf16>, vector<128x128xbf16>, vector<16x128xf32> -> vector<16x128xf32>
      %c0_27 = arith.constant 0 : index
      %c0_28 = arith.constant 0 : index
      %41 = vector.load %arg10[%c0_27, %c0_28] : memref<16x128xf32, #tpu.memory_space<vmem>>, vector<16x128xf32>
      tpu.vector_store %arg10[%c0_27, %c0_28], %40 {strides = array<i32>} : memref<16x128xf32, #tpu.memory_space<vmem>>, vector<16x128xf32>,
    } else {
    }
    return
  }
  func.func @transform_0(%arg0: i32) -> (i32, i32) {
    %c0_i32 = arith.constant 0 : i32
    %c0_i32_0 = arith.constant 0 : i32
    return %arg0, %c0_i32 : i32, i32
  }
  func.func @transform_1(%arg0: i32) -> (i32, i32) {
    %c0_i32 = arith.constant 0 : i32
    %c0_i32_0 = arith.constant 0 : i32
    %c0_i32_1 = arith.constant 0 : i32
    return %c0_i32, %c0_i32_0 : i32, i32
  }
  func.func @transform_2(%arg0: i32) -> (i32, i32) {
    %c0_i32 = arith.constant 0 : i32
    %c0_i32_0 = arith.constant 0 : i32
    %c0_i32_1 = arith.constant 0 : i32
    return %c0_i32, %c0_i32_0 : i32, i32
  }
  func.func @transform_3(%arg0: i32) -> (i32, i32) {
    %c0_i32 = arith.constant 0 : i32
    %c0_i32_0 = arith.constant 0 : i32
    %c0_i32_1 = arith.constant 0 : i32
    return %c0_i32, %c0_i32_0 : i32, i32
  }
  func.func @transform_4(%arg0: i32) -> (i32, i32) {
    %c0_i32 = arith.constant 0 : i32
    %c0_i32_0 = arith.constant 0 : i32
    %c0_i32_1 = arith.constant 0 : i32
    return %c0_i32, %c0_i32_0 : i32, i32
  }
  func.func @transform_5(%arg0: i32) -> (i32, i32) {
    %c0_i32 = arith.constant 0 : i32
    %c0_i32_0 = arith.constant 0 : i32
    %c0_i32_1 = arith.constant 0 : i32
    return %c0_i32, %c0_i32_0 : i32, i32
  }
  func.func @transform_6(%arg0: i32) -> (i32, i32) {
    %c0_i32 = arith.constant 0 : i32
    %c0_i32_0 = arith.constant 0 : i32
    %c0_i32_1 = arith.constant 0 : i32
    return %c0_i32, %c0_i32_0 : i32, i32
  }
  func.func @transform_7(%arg0: i32) -> (i32, i32) {
    %c0_i32 = arith.constant 0 : i32
    %c0_i32_0 = arith.constant 0 : i32
    %c0_i32_1 = arith.constant 0 : i32
    return %c0_i32, %c0_i32_0 : i32, i32
  }
  func.func @transform_8(%arg0: i32) -> (i32, i32) {
    %c0_i32 = arith.constant 0 : i32
    %c0_i32_0 = arith.constant 0 : i32
    %c0_i32_1 = arith.constant 0 : i32
    return %c0_i32, %c0_i32_0 : i32, i32
  }
  func.func @transform_9(%arg0: i32) -> (i32, i32) {
    %c0_i32 = arith.constant 0 : i32
    %c0_i32_0 = arith.constant 0 : i32
    %c0_i32_1 = arith.constant 0 : i32
    return %c0_i32, %c0_i32_0 : i32, i32
  }
}

</mosaic_0001>

<llo_original>
// kernel: tpu_custom_call.1
$region0: #{tpu_custom_call.1}
  #allocation0 [shape = 'u32[]', space=smem, size = 0x4, offset = 0x4, fixed_abs, tag = 'smem constant byte address 0x4 - core index']
  #allocation1 [shape = 'u32[144,128]{1,0:T(1,128)}', space=vmem, size = 0x12000, scoped, tag = 'internal scratch']
  #allocation2 [shape = 'bf16[256,128]{1,0:T(16,128)(2,1)}', space=vmem, size = 0x10000, scoped, tag = 'scratch operand']
  %s0 = inlined_call_operand.vmem [shape: bf16[256,256], index: 0, kind: input, shape index: {}]
  %s1 = inlined_call_operand.hbm [shape: bf16[256,128], index: 1, kind: input, shape index: {}]
  %s2 = inlined_call_operand.vmem [shape: f32[256,1], index: 2, kind: input, shape index: {}]
  %s3 = inlined_call_operand.vmem [shape: bf16[16,256], index: 3, kind: input, shape index: {}]
  %s4 = inlined_call_operand.vmem [shape: bf16[16,256], index: 4, kind: input, shape index: {}]
  %s5 = inlined_call_operand.vmem [shape: f32[16,1], index: 5, kind: input, shape index: {}]
  %s6 = inlined_call_operand.hbm [shape: bf16[256,128], index: 6, kind: input, shape index: {}]
  %s7 = inlined_call_operand.hbm [shape: bf16[256,128], index: 7, kind: input, shape index: {}]
  %s8 = inlined_call_operand.hbm [shape: bf16[128,128], index: 8, kind: input, shape index: {}]
  %s9 = inlined_call_operand.hbm [shape: f32[16,128], index: 9, kind: output, shape index: {}]
  %s10 = sld [smem:[#allocation0]]
  $region89: #{tpu_custom_call.1} parent=0
    _
  %s12 = ssub.s32 1, %s10
  %s13 = scalar_select 0, %s12, %s10
  $region1: #{tpu_custom_call.1} parent=0
    #allocation3 [shape = 'u8[65536]{0}', space=vmem, size = 0x10000, scoped, tag = 'input window, operand 1, single buffered']
    #allocation4 [shape = 's32[2]{0}', space=sflag, size = 0x8, scoped, tag = 'scoped memory for tpu_custom_call.1']
    #allocation5 [shape = 's32[2]{0}', space=sflag, size = 0x8, scoped, tag = 'scoped memory for tpu_custom_call.1']
    #allocation6 [shape = 'u8[65536]{0}', space=vmem, size = 0x10000, scoped, tag = 'input window, operand 6, single buffered']
    #allocation7 [shape = 's32[1]{0}', space=sflag, size = 0x4, scoped, tag = 'scoped memory for tpu_custom_call.1']
    #allocation8 [shape = 'u8[65536]{0}', space=vmem, size = 0x10000, scoped, tag = 'input window, operand 7, single buffered']
    #allocation9 [shape = 'u8[32768]{0}', space=vmem, size = 0x8000, scoped, tag = 'input window, operand 8, single buffered']
    #allocation10 [shape = 's32[1]{0}', space=sflag, size = 0x4, scoped, tag = 'scoped memory for tpu_custom_call.1']
    #allocation11 [shape = 'u8[8192]{0}', space=vmem, size = 0x2000, scoped, tag = 'output window, operand 0, single buffered']
    %14 = vsyncpa [#allocation4], 0
    %15 = vsyncpa [#allocation7], 0
    %16 = vsyncpa [#allocation10], 0
    %17 = vsyncpa [#allocation5], 0
    loop: start=0, step=1, limit=4
    $region2: #{tpu_custom_call.1} parent=1 // loop_pre_header
      _
    $region3: #{tpu_custom_call.1} parent=1 // loop_header
      %s19 = sphi 0, %s23
      %p20 = scmp.ge.s32.totalorder %s19, 4
      %s29 = sphi 0, %s31
      %s32 = sphi 0, %s29
      %s33 = sphi 0, %s32
      %s49 = sphi 0, %s33
      %s53 = sphi 0, %s53
      %s55 = sphi 0, %s53
      %s56 = sphi 0, %s55
      %s70 = sphi 0, %s56
      %s74 = sphi 0, %s74
      %s76 = sphi 0, %s74
      %s77 = sphi 0, %s76
      %s91 = sphi 0, %s77
      %s95 = sphi 0, %s95
      %s97 = sphi 0, %s95
      %s98 = sphi 0, %s97
      %s112 = sphi 0, %s98
      %s116 = sphi 0, %s116
      %s118 = sphi 0, %s116
      %s119 = sphi 0, %s118
      %s133 = sphi 0, %s119
      %s137 = sphi 0, %s137
      %s139 = sphi 0, %s137
      %s140 = sphi 0, %s139
      %s154 = sphi 0, %s140
      %s158 = sphi 0, %s158
      %s160 = sphi 0, %s158
      %s161 = sphi 0, %s160
      %s175 = sphi 0, %s161
      %s179 = sphi 0, %s179
      %s181 = sphi 0, %s179
      %s182 = sphi 0, %s181
      %s196 = sphi 0, %s182
      %s200 = sphi 0, %s200
      %s202 = sphi 0, %s200
      %s203 = sphi 0, %s202
      %s217 = sphi 0, %s203
      %s221 = sphi 0, %s221
      %s223 = sphi 0, %s221
      %s224 = sphi 0, %s223
      %s238 = sphi 0, %s224
    $region4: #{tpu_custom_call.1} parent=1 // loop_header_branch
      %22 = sbr.rel (%p20) target = $region8
    $region5: #{tpu_custom_call.1} parent=1 // loop_body
      %s24 = ssub.s32 %s19, 1
      %s25 = ssub.s32 %s19, 2
      %s26 = sadd.s32 %s19, 1
      %s27 = ssub.s32 %s19, %s26
      %p28 = scmp.eq.s32.totalorder %s27, 0
      %s30 = sadd.s32 %s29, 1
      %s31 = scalar_select %p28, %s29, %s30
      %p34 = pneg %p28
      %p35 = scmp.eq.s32.totalorder %s19, 1
      %p36 = por %p34, %p35
      %p37 = scmp.ne.s32.totalorder %s29, %s32
      %p38 = scmp.eq.s32.totalorder %s19, 0
      %p39 = por %p37, %p38
      %p40 = scmp.ne.s32.totalorder %s29, %s32
      %p41 = scmp.eq.s32.totalorder %s24, 1
      %p42 = por %p40, %p41
      %p43 = scmp.ne.s32.totalorder %s32, %s33
      %p44 = scmp.eq.s32.totalorder %s24, 0
      %p45 = por %p43, %p44
      %p46 = scmp.ne.s32.totalorder %s32, %s33
      %p47 = scmp.eq.s32.totalorder %s25, 1
      %p48 = por %p46, %p47
      %p50 = scmp.ne.s32.totalorder %s33, %s49
      %p51 = scmp.eq.s32.totalorder %s25, 0
      %p52 = por %p50, %p51
      %s54 = sadd.s32 %s53, 1
      %p57 = scmp.eq.s32.totalorder %s19, 1
      %p58 = scmp.ne.s32.totalorder %s53, %s55
      %p59 = scmp.eq.s32.totalorder %s19, 0
      %p60 = por %p58, %p59
      %p61 = scmp.ne.s32.totalorder %s53, %s55
      %p62 = scmp.eq.s32.totalorder %s24, 1
      %p63 = por %p61, %p62
      %p64 = scmp.ne.s32.totalorder %s55, %s56
      %p65 = scmp.eq.s32.totalorder %s24, 0
      %p66 = por %p64, %p65
      %p67 = scmp.ne.s32.totalorder %s55, %s56
      %p68 = scmp.eq.s32.totalorder %s25, 1
      %p69 = por %p67, %p68
      %p71 = scmp.ne.s32.totalorder %s56, %s70
      %p72 = scmp.eq.s32.totalorder %s25, 0
      %p73 = por %p71, %p72
      %s75 = sadd.s32 %s74, 1
      %p78 = scmp.eq.s32.totalorder %s19, 1
      %p79 = scmp.ne.s32.totalorder %s74, %s76
      %p80 = scmp.eq.s32.totalorder %s19, 0
      %p81 = por %p79, %p80
      %p82 = scmp.ne.s32.totalorder %s74, %s76
      %p83 = scmp.eq.s32.totalorder %s24, 1
      %p84 = por %p82, %p83
      %p85 = scmp.ne.s32.totalorder %s76, %s77
      %p86 = scmp.eq.s32.totalorder %s24, 0
      %p87 = por %p85, %p86
      %p88 = scmp.ne.s32.totalorder %s76, %s77
      %p89 = scmp.eq.s32.totalorder %s25, 1
      %p90 = por %p88, %p89
      %p92 = scmp.ne.s32.totalorder %s77, %s91
      %p93 = scmp.eq.s32.totalorder %s25, 0
      %p94 = por %p92, %p93
      %s96 = sadd.s32 %s95, 1
      %p99 = scmp.eq.s32.totalorder %s19, 1
      %p100 = scmp.ne.s32.totalorder %s95, %s97
      %p101 = scmp.eq.s32.totalorder %s19, 0
      %p102 = por %p100, %p101
      %p103 = scmp.ne.s32.totalorder %s95, %s97
      %p104 = scmp.eq.s32.totalorder %s24, 1
      %p105 = por %p103, %p104
      %p106 = scmp.ne.s32.totalorder %s97, %s98
      %p107 = scmp.eq.s32.totalorder %s24, 0
      %p108 = por %p106, %p107
      %p109 = scmp.ne.s32.totalorder %s97, %s98
      %p110 = scmp.eq.s32.totalorder %s25, 1
      %p111 = por %p109, %p110
      %p113 = scmp.ne.s32.totalorder %s98, %s112
      %p114 = scmp.eq.s32.totalorder %s25, 0
      %p115 = por %p113, %p114
      %s117 = sadd.s32 %s116, 1
      %p120 = scmp.eq.s32.totalorder %s19, 1
      %p121 = scmp.ne.s32.totalorder %s116, %s118
      %p122 = scmp.eq.s32.totalorder %s19, 0
      %p123 = por %p121, %p122
      %p124 = scmp.ne.s32.totalorder %s116, %s118
      %p125 = scmp.eq.s32.totalorder %s24, 1
      %p126 = por %p124, %p125
      %p127 = scmp.ne.s32.totalorder %s118, %s119
      %p128 = scmp.eq.s32.totalorder %s24, 0
      %p129 = por %p127, %p128
      %p130 = scmp.ne.s32.totalorder %s118, %s119
      %p131 = scmp.eq.s32.totalorder %s25, 1
      %p132 = por %p130, %p131
      %p134 = scmp.ne.s32.totalorder %s119, %s133
      %p135 = scmp.eq.s32.totalorder %s25, 0
      %p136 = por %p134, %p135
      %s138 = sadd.s32 %s137, 1
      %p141 = scmp.eq.s32.totalorder %s19, 1
      %p142 = scmp.ne.s32.totalorder %s137, %s139
      %p143 = scmp.eq.s32.totalorder %s19, 0
      %p144 = por %p142, %p143
      %p145 = scmp.ne.s32.totalorder %s137, %s139
      %p146 = scmp.eq.s32.totalorder %s24, 1
      %p147 = por %p145, %p146
      %p148 = scmp.ne.s32.totalorder %s139, %s140
      %p149 = scmp.eq.s32.totalorder %s24, 0
      %p150 = por %p148, %p149
      %p151 = scmp.ne.s32.totalorder %s139, %s140
      %p152 = scmp.eq.s32.totalorder %s25, 1
      %p153 = por %p151, %p152
      %p155 = scmp.ne.s32.totalorder %s140, %s154
      %p156 = scmp.eq.s32.totalorder %s25, 0
      %p157 = por %p155, %p156
      %s159 = sadd.s32 %s158, 1
      %p162 = scmp.eq.s32.totalorder %s19, 1
      %p163 = scmp.ne.s32.totalorder %s158, %s160
      %p164 = scmp.eq.s32.totalorder %s19, 0
      %p165 = por %p163, %p164
      %p166 = scmp.ne.s32.totalorder %s158, %s160
      %p167 = scmp.eq.s32.totalorder %s24, 1
      %p168 = por %p166, %p167
      %p169 = scmp.ne.s32.totalorder %s160, %s161
      %p170 = scmp.eq.s32.totalorder %s24, 0
      %p171 = por %p169, %p170
      %p172 = scmp.ne.s32.totalorder %s160, %s161
      %p173 = scmp.eq.s32.totalorder %s25, 1
      %p174 = por %p172, %p173
      %p176 = scmp.ne.s32.totalorder %s161, %s175
      %p177 = scmp.eq.s32.totalorder %s25, 0
      %p178 = por %p176, %p177
      %s180 = sadd.s32 %s179, 1
      %p183 = scmp.eq.s32.totalorder %s19, 1
      %p184 = scmp.ne.s32.totalorder %s179, %s181
      %p185 = scmp.eq.s32.totalorder %s19, 0
      %p186 = por %p184, %p185
      %p187 = scmp.ne.s32.totalorder %s179, %s181
      %p188 = scmp.eq.s32.totalorder %s24, 1
      %p189 = por %p187, %p188
      %p190 = scmp.ne.s32.totalorder %s181, %s182
      %p191 = scmp.eq.s32.totalorder %s24, 0
      %p192 = por %p190, %p191
      %p193 = scmp.ne.s32.totalorder %s181, %s182
      %p194 = scmp.eq.s32.totalorder %s25, 1
      %p195 = por %p193, %p194
      %p197 = scmp.ne.s32.totalorder %s182, %s196
      %p198 = scmp.eq.s32.totalorder %s25, 0
      %p199 = por %p197, %p198
      %s201 = sadd.s32 %s200, 1
      %p204 = scmp.eq.s32.totalorder %s19, 1
      %p205 = scmp.ne.s32.totalorder %s200, %s202
      %p206 = scmp.eq.s32.totalorder %s19, 0
      %p207 = por %p205, %p206
      %p208 = scmp.ne.s32.totalorder %s200, %s202
      %p209 = scmp.eq.s32.totalorder %s24, 1
      %p210 = por %p208, %p209
      %p211 = scmp.ne.s32.totalorder %s202, %s203
      %p212 = scmp.eq.s32.totalorder %s24, 0
      %p213 = por %p211, %p212
      %p214 = scmp.ne.s32.totalorder %s202, %s203
      %p215 = scmp.eq.s32.totalorder %s25, 1
      %p216 = por %p214, %p215
      %p218 = scmp.ne.s32.totalorder %s203, %s217
      %p219 = scmp.eq.s32.totalorder %s25, 0
      %p220 = por %p218, %p219
      %s222 = sadd.s32 %s221, 1
      %p225 = scmp.eq.s32.totalorder %s19, 1
      %p226 = scmp.ne.s32.totalorder %s221, %s223
      %p227 = scmp.eq.s32.totalorder %s19, 0
      %p228 = por %p226, %p227
      %p229 = scmp.ne.s32.totalorder %s221, %s223
      %p230 = scmp.eq.s32.totalorder %s24, 1
      %p231 = por %p229, %p230
      %p232 = scmp.ne.s32.totalorder %s223, %s224
      %p233 = scmp.eq.s32.totalorder %s24, 0
      %p234 = por %p232, %p233
      %p235 = scmp.ne.s32.totalorder %s223, %s224
      %p236 = scmp.eq.s32.totalorder %s25, 1
      %p237 = por %p235, %p236
      %p239 = scmp.ne.s32.totalorder %s224, %s238
      %p240 = scmp.eq.s32.totalorder %s25, 0
      %p241 = por %p239, %p240
      %p242 = scmp.le.s32.totalorder 1, %s19
      %p243 = scmp.lt.s32.totalorder %s19, 3
      %p244 = pnand %p242, %p243
      %p245 = pneg %p244
      // Predicated region
      $region9: #{tpu_custom_call.1} parent=5 // pred_check
        _
      $region10: #{tpu_custom_call.1} parent=5 // pred_check_branch
        %247 = sbr.rel (%p244) target = $region12
      $region11: #{tpu_custom_call.1} parent=5 // pred_region
        %s248 = ssub.s32 %s19, 1
        // Predicated region
        $region13: #{tpu_custom_call.1} parent=11 // pred_check
          %p249 = pneg %p66
        $region14: #{tpu_custom_call.1} parent=11 // pred_check_branch
          %251 = sbr.rel (%p249) target = $region16
        $region15: #{tpu_custom_call.1} parent=11 // pred_region
          %s253 = ssub.s32 2048, 2048
          %254 = vsyncadd [#allocation4], %s253
          %s255 = sshll.u32 [#allocation3], 4
          %s256 = int_to_ptr.vmem [resolvable:$true] %s255
          %261 = dma.hbm_to_vmem [thread:$0]  %s1, 2048, %s256, [#allocation4], 64, 64, 4
        $region16: #{tpu_custom_call.1} parent=11 // pred_fallthru
          _
        // Predicated region
        $region17: #{tpu_custom_call.1} parent=11 // pred_check
          %p262 = pneg %p87
        $region18: #{tpu_custom_call.1} parent=11 // pred_check_branch
          %264 = sbr.rel (%p262) target = $region20
        $region19: #{tpu_custom_call.1} parent=11 // pred_region
          _
        $region20: #{tpu_custom_call.1} parent=11 // pred_fallthru
          _
        // Predicated region
        $region21: #{tpu_custom_call.1} parent=11 // pred_check
          %p265 = pneg %p108
        $region22: #{tpu_custom_call.1} parent=11 // pred_check_branch
          %267 = sbr.rel (%p265) target = $region24
        $region23: #{tpu_custom_call.1} parent=11 // pred_region
          _
        $region24: #{tpu_custom_call.1} parent=11 // pred_fallthru
          _
        // Predicated region
        $region25: #{tpu_custom_call.1} parent=11 // pred_check
          %p268 = pneg %p129
        $region26: #{tpu_custom_call.1} parent=11 // pred_check_branch
          %270 = sbr.rel (%p268) target = $region28
        $region27: #{tpu_custom_call.1} parent=11 // pred_region
          _
        $region28: #{tpu_custom_call.1} parent=11 // pred_fallthru
          _
        // Predicated region
        $region29: #{tpu_custom_call.1} parent=11 // pred_check
          %p271 = pneg %p150
        $region30: #{tpu_custom_call.1} parent=11 // pred_check_branch
          %273 = sbr.rel (%p271) target = $region32
        $region31: #{tpu_custom_call.1} parent=11 // pred_region
          _
        $region32: #{tpu_custom_call.1} parent=11 // pred_fallthru
          _
        // Predicated region
        $region33: #{tpu_custom_call.1} parent=11 // pred_check
          %p274 = pneg %p171
        $region34: #{tpu_custom_call.1} parent=11 // pred_check_branch
          %276 = sbr.rel (%p274) target = $region36
        $region35: #{tpu_custom_call.1} parent=11 // pred_region
          %s278 = ssub.s32 2048, 2048
          %279 = vsyncadd [#allocation7], %s278
          %s280 = sshll.u32 [#allocation6], 4
          %s281 = int_to_ptr.vmem [resolvable:$true] %s280
          %286 = dma.hbm_to_vmem [thread:$0]  %s6, 2048, %s281, [#allocation7], 64, 64, 4
        $region36: #{tpu_custom_call.1} parent=11 // pred_fallthru
          _
        // Predicated region
        $region37: #{tpu_custom_call.1} parent=11 // pred_check
          %p287 = pneg %p192
        $region38: #{tpu_custom_call.1} parent=11 // pred_check_branch
          %289 = sbr.rel (%p287) target = $region40
        $region39: #{tpu_custom_call.1} parent=11 // pred_region
          %s291 = ssub.s32 2048, 2048
          %292 = vsyncadd [#allocation7], %s291
          %s293 = sshll.u32 [#allocation8], 4
          %s294 = int_to_ptr.vmem [resolvable:$true] %s293
          %299 = dma.hbm_to_vmem [thread:$0]  %s7, 2048, %s294, [#allocation7], 64, 64, 4
        $region40: #{tpu_custom_call.1} parent=11 // pred_fallthru
          _
        // Predicated region
        $region41: #{tpu_custom_call.1} parent=11 // pred_check
          %p300 = pneg %p213
        $region42: #{tpu_custom_call.1} parent=11 // pred_check_branch
          %302 = sbr.rel (%p300) target = $region44
        $region43: #{tpu_custom_call.1} parent=11 // pred_region
          %s304 = ssub.s32 1024, 1024
          %305 = vsyncadd [#allocation10], %s304
          %s306 = sshll.u32 [#allocation9], 4
          %s307 = int_to_ptr.vmem [resolvable:$true] %s306
          %312 = dma.hbm_to_vmem [thread:$0]  %s8, 1024, %s307, [#allocation10], 64, 64, 4
        $region44: #{tpu_custom_call.1} parent=11 // pred_fallthru
          _
      $region12: #{tpu_custom_call.1} parent=5 // pred_fallthru
        _
      %p313 = scmp.lt.s32.totalorder %s19, 2
      // Predicated region
      $region45: #{tpu_custom_call.1} parent=5 // pred_check
        %p314 = pneg %p313
      $region46: #{tpu_custom_call.1} parent=5 // pred_check_branch
        %316 = sbr.rel (%p314) target = $region48
      $region47: #{tpu_custom_call.1} parent=5 // pred_region
        // Predicated region
        $region49: #{tpu_custom_call.1} parent=47 // pred_check
          %p317 = pneg %p39
        $region50: #{tpu_custom_call.1} parent=47 // pred_check_branch
          %319 = sbr.rel (%p317) target = $region52
        $region51: #{tpu_custom_call.1} parent=47 // pred_region
          %s320 = smul.u32 16, %s19
          %p321 = scmp.lt.s32.totalorder %s320, 31
          %s322 = scalar_select %p321, %s320, 31
          %s323 = smul.addr %s322, 2
          %s324 = smul.addr %s323, 4
          %s325 = scalar_lea.vmem %s0, %s324
          %s326 = smul.u32 16, %s19
        $region52: #{tpu_custom_call.1} parent=47 // pred_fallthru
          _
      $region48: #{tpu_custom_call.1} parent=5 // pred_fallthru
        _
      %p327 = scmp.le.s32.totalorder 1, %s19
      %p328 = scmp.lt.s32.totalorder %s19, 3
      %p329 = pnand %p327, %p328
      %p330 = pneg %p329
      // Predicated region
      $region53: #{tpu_custom_call.1} parent=5 // pred_check
        _
      $region54: #{tpu_custom_call.1} parent=5 // pred_check_branch
        %332 = sbr.rel (%p329) target = $region56
      $region55: #{tpu_custom_call.1} parent=5 // pred_region
        %s333 = ssub.s32 %s19, 1
        // Predicated region
        $region57: #{tpu_custom_call.1} parent=55 // pred_check
          %p334 = pneg %p66
        $region58: #{tpu_custom_call.1} parent=55 // pred_check_branch
          %336 = sbr.rel (%p334) target = $region60
        $region59: #{tpu_custom_call.1} parent=55 // pred_region
          %337 = dma.done [#allocation4], 2048
        $region60: #{tpu_custom_call.1} parent=55 // pred_fallthru
          _
        // Predicated region
        $region61: #{tpu_custom_call.1} parent=55 // pred_check
          %p338 = pneg %p171
        $region62: #{tpu_custom_call.1} parent=55 // pred_check_branch
          %340 = sbr.rel (%p338) target = $region64
        $region63: #{tpu_custom_call.1} parent=55 // pred_region
          %341 = dma.done [#allocation7], 2048
        $region64: #{tpu_custom_call.1} parent=55 // pred_fallthru
          _
        // Predicated region
        $region65: #{tpu_custom_call.1} parent=55 // pred_check
          %p342 = pneg %p192
        $region66: #{tpu_custom_call.1} parent=55 // pred_check_branch
          %344 = sbr.rel (%p342) target = $region68
        $region67: #{tpu_custom_call.1} parent=55 // pred_region
          %345 = dma.done [#allocation7], 2048
        $region68: #{tpu_custom_call.1} parent=55 // pred_fallthru
          _
        // Predicated region
        $region69: #{tpu_custom_call.1} parent=55 // pred_check
          %p346 = pneg %p213
        $region70: #{tpu_custom_call.1} parent=55 // pred_check_branch
          %348 = sbr.rel (%p346) target = $region72
        $region71: #{tpu_custom_call.1} parent=55 // pred_region
          %349 = dma.done [#allocation10], 1024
        $region72: #{tpu_custom_call.1} parent=55 // pred_fallthru
          _
        %s350 = smul.u32 16, %s24
        %p351 = scmp.lt.s32.totalorder %s350, 31
        %s352 = scalar_select %p351, %s350, 31
        %s353 = smul.addr %s352, 2
        %s354 = smul.addr %s353, 4
        %s355 = scalar_lea.vmem %s0, %s354
        %p356 = pneg %p45
        %p357 = pneg %p42
        %p358 = pneg %p66
        %p359 = pneg %p63
        %p360 = pneg %p87
        %p361 = pneg %p84
        %p362 = pneg %p108
        %p363 = pneg %p105
        %p364 = pneg %p129
        %p365 = pneg %p126
        %p366 = pneg %p150
        %p367 = pneg %p147
        %p368 = pneg %p171
        %p369 = pneg %p168
        %p370 = pneg %p192
        %p371 = pneg %p189
        %p372 = pneg %p213
        %p373 = pneg %p210
        %p374 = pneg %p234
        %p375 = pneg %p231
        %s376 = smul.u32 16, %s24
        %p377 = scmp.lt.s32.totalorder %s376, 31
        %s378 = scalar_select %p377, %s376, 31
        %s379 = smul.addr %s378, 2
        %s380 = smul.addr %s379, 4
        %s381 = scalar_lea.vmem %s0, %s380
        %s382 = smul.u32 16, %s24
        %s384 = smul.u32 %s24, 128
        %v385 = vld [vmem:[#allocation3] sm:$0xf]
        %v386 = vld [vmem:[#allocation3 + $0x4] sm:$0xf]
        %v387 = vld [vmem:[#allocation3 + $0x8] sm:$0xf]
        %v388 = vld [vmem:[#allocation3 + $0xc] sm:$0xf]
        %v389 = vld [vmem:[#allocation3 + $0x10] sm:$0xf]
        %v390 = vld [vmem:[#allocation3 + $0x14] sm:$0xf]
        %v391 = vld [vmem:[#allocation3 + $0x18] sm:$0xf]
        %v392 = vld [vmem:[#allocation3 + $0x1c] sm:$0xf]
        %v393 = vld [vmem:[#allocation3 + $0x20] sm:$0xf]
        %v394 = vld [vmem:[#allocation3 + $0x24] sm:$0xf]
        %v395 = vld [vmem:[#allocation3 + $0x28] sm:$0xf]
        %v396 = vld [vmem:[#allocation3 + $0x2c] sm:$0xf]
        %v397 = vld [vmem:[#allocation3 + $0x30] sm:$0xf]
        %v398 = vld [vmem:[#allocation3 + $0x34] sm:$0xf]
        %v399 = vld [vmem:[#allocation3 + $0x38] sm:$0xf]
        %v400 = vld [vmem:[#allocation3 + $0x3c] sm:$0xf]
        %v401 = vld [vmem:[#allocation3 + $0x40] sm:$0xf]
        %v402 = vld [vmem:[#allocation3 + $0x44] sm:$0xf]
        %v403 = vld [vmem:[#allocation3 + $0x48] sm:$0xf]
        %v404 = vld [vmem:[#allocation3 + $0x4c] sm:$0xf]
        %v405 = vld [vmem:[#allocation3 + $0x50] sm:$0xf]
        %v406 = vld [vmem:[#allocation3 + $0x54] sm:$0xf]
        %v407 = vld [vmem:[#allocation3 + $0x58] sm:$0xf]
        %v408 = vld [vmem:[#allocation3 + $0x5c] sm:$0xf]
        %v409 = vld [vmem:[#allocation3 + $0x60] sm:$0xf]
        %v410 = vld [vmem:[#allocation3 + $0x64] sm:$0xf]
        %v411 = vld [vmem:[#allocation3 + $0x68] sm:$0xf]
        %v412 = vld [vmem:[#allocation3 + $0x6c] sm:$0xf]
        %v413 = vld [vmem:[#allocation3 + $0x70] sm:$0xf]
        %v414 = vld [vmem:[#allocation3 + $0x74] sm:$0xf]
        %v415 = vld [vmem:[#allocation3 + $0x78] sm:$0xf]
        %v416 = vld [vmem:[#allocation3 + $0x7c] sm:$0xf]
        %v417 = vld [vmem:[%s381] sm:$0xff]
        %v418 = vld [vmem:[%s381 + $0x8] sm:$0xff]
        %v419 = vld [vmem:[%s381 + $0x10] sm:$0xff]
        %v420 = vld [vmem:[%s381 + $0x18] sm:$0xff]
        %v421 = vld [vmem:[%s381 + $0x20] sm:$0xff]
        %v422 = vld [vmem:[%s381 + $0x28] sm:$0xff]
        %v423 = vld [vmem:[%s381 + $0x30] sm:$0xff]
        %v424 = vld [vmem:[%s381 + $0x38] sm:$0xff]
        %v425 = vld [vmem:[%s381 + $0x40] sm:$0xff]
        %v426 = vld [vmem:[%s381 + $0x48] sm:$0xff]
        %v427 = vld [vmem:[%s381 + $0x50] sm:$0xff]
        %v428 = vld [vmem:[%s381 + $0x58] sm:$0xff]
        %v429 = vld [vmem:[%s381 + $0x60] sm:$0xff]
        %v430 = vld [vmem:[%s381 + $0x68] sm:$0xff]
        %v431 = vld [vmem:[%s381 + $0x70] sm:$0xff]
        %v432 = vld [vmem:[%s381 + $0x78] sm:$0xff]
        %v449 = vunpack.c.l.b16 %v417
        %v450 = vunpack.c.h.b16 %v417
        %v451 = vunpack.c.l.b16 %v418
        %v452 = vunpack.c.h.b16 %v418
        %v453 = vunpack.c.l.b16 %v419
        %v454 = vunpack.c.h.b16 %v419
        %v455 = vunpack.c.l.b16 %v420
        %v456 = vunpack.c.h.b16 %v420
        %v457 = vunpack.c.l.b16 %v421
        %v458 = vunpack.c.h.b16 %v421
        %v459 = vunpack.c.l.b16 %v422
        %v460 = vunpack.c.h.b16 %v422
        %v461 = vunpack.c.l.b16 %v423
        %v462 = vunpack.c.h.b16 %v423
        %v463 = vunpack.c.l.b16 %v424
        %v464 = vunpack.c.h.b16 %v424
        %v465 = vunpack.c.l.b16 %v425
        %v466 = vunpack.c.h.b16 %v425
        %v467 = vunpack.c.l.b16 %v426
        %v468 = vunpack.c.h.b16 %v426
        %v469 = vunpack.c.l.b16 %v427
        %v470 = vunpack.c.h.b16 %v427
        %v471 = vunpack.c.l.b16 %v428
        %v472 = vunpack.c.h.b16 %v428
        %v473 = vunpack.c.l.b16 %v429
        %v474 = vunpack.c.h.b16 %v429
        %v475 = vunpack.c.l.b16 %v430
        %v476 = vunpack.c.h.b16 %v430
        %v477 = vunpack.c.l.b16 %v431
        %v478 = vunpack.c.h.b16 %v431
        %v479 = vunpack.c.l.b16 %v432
        %v480 = vunpack.c.h.b16 %v432
        %v481 = vpack.c.b16 %v451, %v449
        %v482 = vpack.c.b16 %v452, %v450
        %v483 = vpack.c.b16 %v455, %v453
        %v484 = vpack.c.b16 %v456, %v454
        %v485 = vpack.c.b16 %v459, %v457
        %v486 = vpack.c.b16 %v460, %v458
        %v487 = vpack.c.b16 %v463, %v461
        %v488 = vpack.c.b16 %v464, %v462
        %v489 = vpack.c.b16 %v467, %v465
        %v490 = vpack.c.b16 %v468, %v466
        %v491 = vpack.c.b16 %v471, %v469
        %v492 = vpack.c.b16 %v472, %v470
        %v493 = vpack.c.b16 %v475, %v473
        %v494 = vpack.c.b16 %v476, %v474
        %v495 = vpack.c.b16 %v479, %v477
        %v496 = vpack.c.b16 %v480, %v478
        %v545 = vunpack.c.l.b16 %v385
        %v546 = vunpack.c.l.b16 %v386
        %v547 = vunpack.c.l.b16 %v387
        %v548 = vunpack.c.l.b16 %v388
        %v549 = vunpack.c.l.b16 %v389
        %v550 = vunpack.c.l.b16 %v390
        %v551 = vunpack.c.l.b16 %v391
        %v552 = vunpack.c.l.b16 %v392
        %v553 = vunpack.c.l.b16 %v393
        %v554 = vunpack.c.l.b16 %v394
        %v555 = vunpack.c.l.b16 %v395
        %v556 = vunpack.c.l.b16 %v396
        %v557 = vunpack.c.l.b16 %v397
        %v558 = vunpack.c.l.b16 %v398
        %v559 = vunpack.c.l.b16 %v399
        %v560 = vunpack.c.l.b16 %v400
        %v561 = vunpack.c.l.b16 %v401
        %v562 = vunpack.c.l.b16 %v402
        %v563 = vunpack.c.l.b16 %v403
        %v564 = vunpack.c.l.b16 %v404
        %v565 = vunpack.c.l.b16 %v405
        %v566 = vunpack.c.l.b16 %v406
        %v567 = vunpack.c.l.b16 %v407
        %v568 = vunpack.c.l.b16 %v408
        %v569 = vunpack.c.l.b16 %v409
        %v570 = vunpack.c.l.b16 %v410
        %v571 = vunpack.c.l.b16 %v411
        %v572 = vunpack.c.l.b16 %v412
        %v573 = vunpack.c.l.b16 %v413
        %v574 = vunpack.c.l.b16 %v414
        %v575 = vunpack.c.l.b16 %v415
        %v576 = vunpack.c.l.b16 %v416
        %v577 = vpack.c.b16 %v546, %v545
        %v578 = vpack.c.b16 %v548, %v547
        %v579 = vpack.c.b16 %v550, %v549
        %v580 = vpack.c.b16 %v552, %v551
        %v581 = vpack.c.b16 %v554, %v553
        %v582 = vpack.c.b16 %v556, %v555
        %v583 = vpack.c.b16 %v558, %v557
        %v584 = vpack.c.b16 %v560, %v559
        %v585 = vpack.c.b16 %v562, %v561
        %v586 = vpack.c.b16 %v564, %v563
        %v587 = vpack.c.b16 %v566, %v565
        %v588 = vpack.c.b16 %v568, %v567
        %v589 = vpack.c.b16 %v570, %v569
        %v590 = vpack.c.b16 %v572, %v571
        %v591 = vpack.c.b16 %v574, %v573
        %v592 = vpack.c.b16 %v576, %v575
        %609 = vmatprep.subr.bf16.mxu0 0
        %610 = vmatpush1.bf16.msra.mxu0 %v577
        %611 = vmatprep.subr.bf16.mxu0 0
        %612 = vmatpush1.bf16.msra.mxu0 %v578
        %613 = vmatprep.subr.bf16.mxu0 0
        %614 = vmatpush1.bf16.msra.mxu0 %v579
        %615 = vmatprep.subr.bf16.mxu0 0
        %616 = vmatpush1.bf16.msra.mxu0 %v580
        %617 = vmatprep.subr.bf16.mxu0 0
        %618 = vmatpush1.bf16.msra.mxu0 %v581
        %619 = vmatprep.subr.bf16.mxu0 0
        %620 = vmatpush1.bf16.msra.mxu0 %v582
        %621 = vmatprep.subr.bf16.mxu0 0
        %622 = vmatpush1.bf16.msra.mxu0 %v583
        %623 = vmatprep.subr.bf16.mxu0 0
        %624 = vmatpush1.bf16.msra.mxu0 %v584
        %625 = vmatprep.subr.bf16.mxu0 0
        %626 = vmatpush1.bf16.msra.mxu0 %v585
        %627 = vmatprep.subr.bf16.mxu0 0
        %628 = vmatpush1.bf16.msra.mxu0 %v586
        %629 = vmatprep.subr.bf16.mxu0 0
        %630 = vmatpush1.bf16.msra.mxu0 %v587
        %631 = vmatprep.subr.bf16.mxu0 0
        %632 = vmatpush1.bf16.msra.mxu0 %v588
        %633 = vmatprep.subr.bf16.mxu0 0
        %634 = vmatpush1.bf16.msra.mxu0 %v589
        %635 = vmatprep.subr.bf16.mxu0 0
        %636 = vmatpush1.bf16.msra.mxu0 %v590
        %637 = vmatprep.subr.bf16.mxu0 0
        %638 = vmatpush1.bf16.msra.mxu0 %v591
        %639 = vmatprep.subr.bf16.mxu0 0
        %640 = vmatpush1.bf16.msra.mxu0 %v592
        %641 = vmatprep.mubr.bf16.mxu0 %v482
        %642 = vmatmul.mubr.bf16.gmra.mrb[0].mxu0 %v481
        %v643 = vpop.f32.mrb[0].mxu0
        %v644 = vadd.f32 0.0, %v643
        %v645 = vpop.f32.mrb[0].mxu0
        %v646 = vpop.f32.mrb[0].mxu0
        %v647 = vadd.f32 0.0, %v646
        %v648 = vpop.f32.mrb[0].mxu0
        %649 = vmatprep.mubr.bf16.mxu0 %v484
        %650 = vmatmul.mubr.bf16.gmra.mrb[0].mxu0 %v483
        %v651 = vpop.f32.mrb[0].mxu0
        %v652 = vadd.f32 0.0, %v651
        %v653 = vpop.f32.mrb[0].mxu0
        %v654 = vpop.f32.mrb[0].mxu0
        %v655 = vadd.f32 0.0, %v654
        %v656 = vpop.f32.mrb[0].mxu0
        %657 = vmatprep.mubr.bf16.mxu0 %v486
        %658 = vmatmul.mubr.bf16.gmra.mrb[0].mxu0 %v485
        %v659 = vpop.f32.mrb[0].mxu0
        %v660 = vadd.f32 0.0, %v659
        %v661 = vpop.f32.mrb[0].mxu0
        %v662 = vpop.f32.mrb[0].mxu0
        %v663 = vadd.f32 0.0, %v662
        %v664 = vpop.f32.mrb[0].mxu0
        %665 = vmatprep.mubr.bf16.mxu0 %v488
        %666 = vmatmul.mubr.bf16.gmra.mrb[0].mxu0 %v487
        %v667 = vpop.f32.mrb[0].mxu0
        %v668 = vadd.f32 0.0, %v667
        %v669 = vpop.f32.mrb[0].mxu0
        %v670 = vpop.f32.mrb[0].mxu0
        %v671 = vadd.f32 0.0, %v670
        %v672 = vpop.f32.mrb[0].mxu0
        %673 = vmatprep.mubr.bf16.mxu0 %v490
        %674 = vmatmul.mubr.bf16.gmra.mrb[0].mxu0 %v489
        %v675 = vpop.f32.mrb[0].mxu0
        %v676 = vadd.f32 0.0, %v675
        %v677 = vpop.f32.mrb[0].mxu0
        %v678 = vpop.f32.mrb[0].mxu0
        %v679 = vadd.f32 0.0, %v678
        %v680 = vpop.f32.mrb[0].mxu0
        %681 = vmatprep.mubr.bf16.mxu0 %v492
        %682 = vmatmul.mubr.bf16.gmra.mrb[0].mxu0 %v491
        %v683 = vpop.f32.mrb[0].mxu0
        %v684 = vadd.f32 0.0, %v683
        %v685 = vpop.f32.mrb[0].mxu0
        %v686 = vpop.f32.mrb[0].mxu0
        %v687 = vadd.f32 0.0, %v686
        %v688 = vpop.f32.mrb[0].mxu0
        %689 = vmatprep.mubr.bf16.mxu0 %v494
        %690 = vmatmul.mubr.bf16.gmra.mrb[0].mxu0 %v493
        %v691 = vpop.f32.mrb[0].mxu0
        %v692 = vadd.f32 0.0, %v691
        %v693 = vpop.f32.mrb[0].mxu0
        %v694 = vpop.f32.mrb[0].mxu0
        %v695 = vadd.f32 0.0, %v694
        %v696 = vpop.f32.mrb[0].mxu0
        %697 = vmatprep.mubr.bf16.mxu0 %v496
        %698 = vmatmul.mubr.bf16.gmra.mrb[0].mxu0 %v495
        %v699 = vpop.f32.mrb[0].mxu0
        %v700 = vadd.f32 0.0, %v699
        %v701 = vpop.f32.mrb[0].mxu0
        %v702 = vpop.f32.mrb[0].mxu0
        %v703 = vadd.f32 0.0, %v702
        %v704 = vpop.f32.mrb[0].mxu0
        %705 = vdwg.mxu0
        %s706 = scalar_lea.vmem %s2, %s384
        %v707 = vld [vmem:[%s706] sm:$0xff]
        %v708 = vld [vmem:[%s706 + $0x8] sm:$0xff]
        %v709 = vld [vmem:[%s706 + $0x10] sm:$0xff]
        %v710 = vld [vmem:[%s706 + $0x18] sm:$0xff]
        %v711 = vld [vmem:[%s706 + $0x20] sm:$0xff]
        %v712 = vld [vmem:[%s706 + $0x28] sm:$0xff]
        %v713 = vld [vmem:[%s706 + $0x30] sm:$0xff]
        %v714 = vld [vmem:[%s706 + $0x38] sm:$0xff]
        %v715 = vld [vmem:[%s706 + $0x40] sm:$0xff]
        %v716 = vld [vmem:[%s706 + $0x48] sm:$0xff]
        %v717 = vld [vmem:[%s706 + $0x50] sm:$0xff]
        %v718 = vld [vmem:[%s706 + $0x58] sm:$0xff]
        %v719 = vld [vmem:[%s706 + $0x60] sm:$0xff]
        %v720 = vld [vmem:[%s706 + $0x68] sm:$0xff]
        %v721 = vld [vmem:[%s706 + $0x70] sm:$0xff]
        %v722 = vld [vmem:[%s706 + $0x78] sm:$0xff]
        %724 = vset.pattern.permute.xlu0 0
        %725 = vperm.xlu0 %724, %v707
        %v726 = vpop.permute.xlu0 %725
        %729 = vset.pattern.permute.xlu0 0
        %730 = vperm.xlu0 %729, %v708
        %v731 = vpop.permute.xlu0 %730
        %734 = vset.pattern.permute.xlu0 0
        %735 = vperm.xlu0 %734, %v709
        %v736 = vpop.permute.xlu0 %735
        %739 = vset.pattern.permute.xlu0 0
        %740 = vperm.xlu0 %739, %v710
        %v741 = vpop.permute.xlu0 %740
        %744 = vset.pattern.permute.xlu0 0
        %745 = vperm.xlu0 %744, %v711
        %v746 = vpop.permute.xlu0 %745
        %749 = vset.pattern.permute.xlu0 0
        %750 = vperm.xlu0 %749, %v712
        %v751 = vpop.permute.xlu0 %750
        %754 = vset.pattern.permute.xlu0 0
        %755 = vperm.xlu0 %754, %v713
        %v756 = vpop.permute.xlu0 %755
        %759 = vset.pattern.permute.xlu0 0
        %760 = vperm.xlu0 %759, %v714
        %v761 = vpop.permute.xlu0 %760
        %764 = vset.pattern.permute.xlu0 0
        %765 = vperm.xlu0 %764, %v715
        %v766 = vpop.permute.xlu0 %765
        %769 = vset.pattern.permute.xlu0 0
        %770 = vperm.xlu0 %769, %v716
        %v771 = vpop.permute.xlu0 %770
        %774 = vset.pattern.permute.xlu0 0
        %775 = vperm.xlu0 %774, %v717
        %v776 = vpop.permute.xlu0 %775
        %779 = vset.pattern.permute.xlu0 0
        %780 = vperm.xlu0 %779, %v718
        %v781 = vpop.permute.xlu0 %780
        %784 = vset.pattern.permute.xlu0 0
        %785 = vperm.xlu0 %784, %v719
        %v786 = vpop.permute.xlu0 %785
        %789 = vset.pattern.permute.xlu0 0
        %790 = vperm.xlu0 %789, %v720
        %v791 = vpop.permute.xlu0 %790
        %794 = vset.pattern.permute.xlu0 0
        %795 = vperm.xlu0 %794, %v721
        %v796 = vpop.permute.xlu0 %795
        %799 = vset.pattern.permute.xlu0 0
        %800 = vperm.xlu0 %799, %v722
        %v801 = vpop.permute.xlu0 %800
        %v803 = vmul.f32 %v644, %v726
        %v804 = vmul.f32 %v647, %v731
        %v805 = vmul.f32 %v652, %v736
        %v806 = vmul.f32 %v655, %v741
        %v807 = vmul.f32 %v660, %v746
        %v808 = vmul.f32 %v663, %v751
        %v809 = vmul.f32 %v668, %v756
        %v810 = vmul.f32 %v671, %v761
        %v811 = vmul.f32 %v676, %v766
        %v812 = vmul.f32 %v679, %v771
        %v813 = vmul.f32 %v684, %v776
        %v814 = vmul.f32 %v687, %v781
        %v815 = vmul.f32 %v692, %v786
        %v816 = vmul.f32 %v695, %v791
        %v817 = vmul.f32 %v700, %v796
        %v818 = vmul.f32 %v703, %v801
        %s819 = sshra.s32 %s384, 3
        %s820 = sand.u32 %s384, 7
        %s821 = smul.addr %s819, 4
        %s822 = scalar_lea.vmem [#allocation3], %s821
        %v823 = vld [vmem:[%s822] sm:$0xf]
        %v824 = vld [vmem:[%s822 + $0x4] sm:$0xf]
        %v825 = vld [vmem:[%s822 + $0x8] sm:$0xf]
        %v826 = vld [vmem:[%s822 + $0xc] sm:$0xf]
        %v827 = vld [vmem:[%s822 + $0x10] sm:$0xf]
        %v828 = vld [vmem:[%s822 + $0x14] sm:$0xf]
        %v829 = vld [vmem:[%s822 + $0x18] sm:$0xf]
        %v830 = vld [vmem:[%s822 + $0x1c] sm:$0xf]
        %v831 = vld [vmem:[%s822 + $0x20] sm:$0xf]
        %v832 = vld [vmem:[%s822 + $0x24] sm:$0xf]
        %v833 = vld [vmem:[%s822 + $0x28] sm:$0xf]
        %v834 = vld [vmem:[%s822 + $0x2c] sm:$0xf]
        %v835 = vld [vmem:[%s822 + $0x30] sm:$0xf]
        %v836 = vld [vmem:[%s822 + $0x34] sm:$0xf]
        %v837 = vld [vmem:[%s822 + $0x38] sm:$0xf]
        %v838 = vld [vmem:[%s822 + $0x3c] sm:$0xf]
        %v839 = vpack.c.bf16 %v804, %v803
        %v840 = vpack.c.bf16 %v806, %v805
        %v841 = vpack.c.bf16 %v808, %v807
        %v842 = vpack.c.bf16 %v810, %v809
        %v843 = vpack.c.bf16 %v812, %v811
        %v844 = vpack.c.bf16 %v814, %v813
        %v845 = vpack.c.bf16 %v816, %v815
        %v846 = vpack.c.bf16 %v818, %v817
        %v863 = vunpack.c.l.b16 %v823
        %v864 = vunpack.c.l.b16 %v824
        %v865 = vunpack.c.l.b16 %v825
        %v866 = vunpack.c.l.b16 %v826
        %v867 = vunpack.c.l.b16 %v827
        %v868 = vunpack.c.l.b16 %v828
        %v869 = vunpack.c.l.b16 %v829
        %v870 = vunpack.c.l.b16 %v830
        %v871 = vunpack.c.l.b16 %v831
        %v872 = vunpack.c.l.b16 %v832
        %v873 = vunpack.c.l.b16 %v833
        %v874 = vunpack.c.l.b16 %v834
        %v875 = vunpack.c.l.b16 %v835
        %v876 = vunpack.c.l.b16 %v836
        %v877 = vunpack.c.l.b16 %v837
        %v878 = vunpack.c.l.b16 %v838
        %v879 = vpack.c.b16 %v864, %v863
        %v880 = vpack.c.b16 %v866, %v865
        %v881 = vpack.c.b16 %v868, %v867
        %v882 = vpack.c.b16 %v870, %v869
        %v883 = vpack.c.b16 %v872, %v871
        %v884 = vpack.c.b16 %v874, %v873
        %v885 = vpack.c.b16 %v876, %v875
        %v886 = vpack.c.b16 %v878, %v877
        %v895 = vld [vmem:[#allocation6] sm:$0xf]
        %v896 = vld [vmem:[#allocation6 + $0x4] sm:$0xf]
        %v897 = vld [vmem:[#allocation6 + $0x8] sm:$0xf]
        %v898 = vld [vmem:[#allocation6 + $0xc] sm:$0xf]
        %v899 = vld [vmem:[#allocation6 + $0x10] sm:$0xf]
        %v900 = vld [vmem:[#allocation6 + $0x14] sm:$0xf]
        %v901 = vld [vmem:[#allocation6 + $0x18] sm:$0xf]
        %v902 = vld [vmem:[#allocation6 + $0x1c] sm:$0xf]
        %v903 = vld [vmem:[#allocation6 + $0x20] sm:$0xf]
        %v904 = vld [vmem:[#allocation6 + $0x24] sm:$0xf]
        %v905 = vld [vmem:[#allocation6 + $0x28] sm:$0xf]
        %v906 = vld [vmem:[#allocation6 + $0x2c] sm:$0xf]
        %v907 = vld [vmem:[#allocation6 + $0x30] sm:$0xf]
        %v908 = vld [vmem:[#allocation6 + $0x34] sm:$0xf]
        %v909 = vld [vmem:[#allocation6 + $0x38] sm:$0xf]
        %v910 = vld [vmem:[#allocation6 + $0x3c] sm:$0xf]
        %v911 = vld [vmem:[#allocation6 + $0x40] sm:$0xf]
        %v912 = vld [vmem:[#allocation6 + $0x44] sm:$0xf]
        %v913 = vld [vmem:[#allocation6 + $0x48] sm:$0xf]
        %v914 = vld [vmem:[#allocation6 + $0x4c] sm:$0xf]
        %v915 = vld [vmem:[#allocation6 + $0x50] sm:$0xf]
        %v916 = vld [vmem:[#allocation6 + $0x54] sm:$0xf]
        %v917 = vld [vmem:[#allocation6 + $0x58] sm:$0xf]
        %v918 = vld [vmem:[#allocation6 + $0x5c] sm:$0xf]
        %v919 = vld [vmem:[#allocation6 + $0x60] sm:$0xf]
        %v920 = vld [vmem:[#allocation6 + $0x64] sm:$0xf]
        %v921 = vld [vmem:[#allocation6 + $0x68] sm:$0xf]
        %v922 = vld [vmem:[#allocation6 + $0x6c] sm:$0xf]
        %v923 = vld [vmem:[#allocation6 + $0x70] sm:$0xf]
        %v924 = vld [vmem:[#allocation6 + $0x74] sm:$0xf]
        %v925 = vld [vmem:[#allocation6 + $0x78] sm:$0xf]
        %v926 = vld [vmem:[#allocation6 + $0x7c] sm:$0xf]
        %v959 = vunpack.c.l.b16 %v895
        %v960 = vunpack.c.l.b16 %v896
        %v961 = vunpack.c.l.b16 %v897
        %v962 = vunpack.c.l.b16 %v898
        %v963 = vunpack.c.l.b16 %v899
        %v964 = vunpack.c.l.b16 %v900
        %v965 = vunpack.c.l.b16 %v901
        %v966 = vunpack.c.l.b16 %v902
        %v967 = vunpack.c.l.b16 %v903
        %v968 = vunpack.c.l.b16 %v904
        %v969 = vunpack.c.l.b16 %v905
        %v970 = vunpack.c.l.b16 %v906
        %v971 = vunpack.c.l.b16 %v907
        %v972 = vunpack.c.l.b16 %v908
        %v973 = vunpack.c.l.b16 %v909
        %v974 = vunpack.c.l.b16 %v910
        %v975 = vunpack.c.l.b16 %v911
        %v976 = vunpack.c.l.b16 %v912
        %v977 = vunpack.c.l.b16 %v913
        %v978 = vunpack.c.l.b16 %v914
        %v979 = vunpack.c.l.b16 %v915
        %v980 = vunpack.c.l.b16 %v916
        %v981 = vunpack.c.l.b16 %v917
        %v982 = vunpack.c.l.b16 %v918
        %v983 = vunpack.c.l.b16 %v919
        %v984 = vunpack.c.l.b16 %v920
        %v985 = vunpack.c.l.b16 %v921
        %v986 = vunpack.c.l.b16 %v922
        %v987 = vunpack.c.l.b16 %v923
        %v988 = vunpack.c.l.b16 %v924
        %v989 = vunpack.c.l.b16 %v925
        %v990 = vunpack.c.l.b16 %v926
        %v991 = vpack.c.b16 %v960, %v959
        %v992 = vpack.c.b16 %v962, %v961
        %v993 = vpack.c.b16 %v964, %v963
        %v994 = vpack.c.b16 %v966, %v965
        %v995 = vpack.c.b16 %v968, %v967
        %v996 = vpack.c.b16 %v970, %v969
        %v997 = vpack.c.b16 %v972, %v971
        %v998 = vpack.c.b16 %v974, %v973
        %v999 = vpack.c.b16 %v976, %v975
        %v1000 = vpack.c.b16 %v978, %v977
        %v1001 = vpack.c.b16 %v980, %v979
        %v1002 = vpack.c.b16 %v982, %v981
        %v1003 = vpack.c.b16 %v984, %v983
        %v1004 = vpack.c.b16 %v986, %v985
        %v1005 = vpack.c.b16 %v988, %v987
        %v1006 = vpack.c.b16 %v990, %v989
        %1023 = vmatprep.subr.bf16.mxu0 0
        %1024 = vmatpush1.bf16.msra.mxu0 %v991
        %1025 = vmatprep.subr.bf16.mxu0 0
        %1026 = vmatpush1.bf16.msra.mxu0 %v992
        %1027 = vmatprep.subr.bf16.mxu0 0
        %1028 = vmatpush1.bf16.msra.mxu0 %v993
        %1029 = vmatprep.subr.bf16.mxu0 0
        %1030 = vmatpush1.bf16.msra.mxu0 %v994
        %1031 = vmatprep.subr.bf16.mxu0 0
        %1032 = vmatpush1.bf16.msra.mxu0 %v995
        %1033 = vmatprep.subr.bf16.mxu0 0
        %1034 = vmatpush1.bf16.msra.mxu0 %v996
        %1035 = vmatprep.subr.bf16.mxu0 0
        %1036 = vmatpush1.bf16.msra.mxu0 %v997
        %1037 = vmatprep.subr.bf16.mxu0 0
        %1038 = vmatpush1.bf16.msra.mxu0 %v998
        %1039 = vmatprep.subr.bf16.mxu0 0
        %1040 = vmatpush1.bf16.msra.mxu0 %v999
        %1041 = vmatprep.subr.bf16.mxu0 0
        %1042 = vmatpush1.bf16.msra.mxu0 %v1000
        %1043 = vmatprep.subr.bf16.mxu0 0
        %1044 = vmatpush1.bf16.msra.mxu0 %v1001
        %1045 = vmatprep.subr.bf16.mxu0 0
        %1046 = vmatpush1.bf16.msra.mxu0 %v1002
        %1047 = vmatprep.subr.bf16.mxu0 0
        %1048 = vmatpush1.bf16.msra.mxu0 %v1003
        %1049 = vmatprep.subr.bf16.mxu0 0
        %1050 = vmatpush1.bf16.msra.mxu0 %v1004
        %1051 = vmatprep.subr.bf16.mxu0 0
        %1052 = vmatpush1.bf16.msra.mxu0 %v1005
        %1053 = vmatprep.subr.bf16.mxu0 0
        %1054 = vmatpush1.bf16.msra.mxu0 %v1006
        %1055 = vmatprep.mubr.bf16.mxu0 %v839
        %1056 = vmatmul.mubr.bf16.gmra.mrb[0].mxu0 %v879
        %v1057 = vpop.f32.mrb[0].mxu0
        %v1058 = vadd.f32 0.0, %v1057
        %v1059 = vpop.f32.mrb[0].mxu0
        %v1060 = vpop.f32.mrb[0].mxu0
        %v1061 = vadd.f32 0.0, %v1060
        %v1062 = vpop.f32.mrb[0].mxu0
        %1063 = vmatprep.mubr.bf16.mxu0 %v840
        %1064 = vmatmul.mubr.bf16.gmra.mrb[0].mxu0 %v880
        %v1065 = vpop.f32.mrb[0].mxu0
        %v1066 = vadd.f32 0.0, %v1065
        %v1067 = vpop.f32.mrb[0].mxu0
        %v1068 = vpop.f32.mrb[0].mxu0
        %v1069 = vadd.f32 0.0, %v1068
        %v1070 = vpop.f32.mrb[0].mxu0
        %1071 = vmatprep.mubr.bf16.mxu0 %v841
        %1072 = vmatmul.mubr.bf16.gmra.mrb[0].mxu0 %v881
        %v1073 = vpop.f32.mrb[0].mxu0
        %v1074 = vadd.f32 0.0, %v1073
        %v1075 = vpop.f32.mrb[0].mxu0
        %v1076 = vpop.f32.mrb[0].mxu0
        %v1077 = vadd.f32 0.0, %v1076
        %v1078 = vpop.f32.mrb[0].mxu0
        %1079 = vmatprep.mubr.bf16.mxu0 %v842
        %1080 = vmatmul.mubr.bf16.gmra.mrb[0].mxu0 %v882
        %v1081 = vpop.f32.mrb[0].mxu0
        %v1082 = vadd.f32 0.0, %v1081
        %v1083 = vpop.f32.mrb[0].mxu0
        %v1084 = vpop.f32.mrb[0].mxu0
        %v1085 = vadd.f32 0.0, %v1084
        %v1086 = vpop.f32.mrb[0].mxu0
        %1087 = vmatprep.mubr.bf16.mxu0 %v843
        %1088 = vmatmul.mubr.bf16.gmra.mrb[0].mxu0 %v883
        %v1089 = vpop.f32.mrb[0].mxu0
        %v1090 = vadd.f32 0.0, %v1089
        %v1091 = vpop.f32.mrb[0].mxu0
        %v1092 = vpop.f32.mrb[0].mxu0
        %v1093 = vadd.f32 0.0, %v1092
        %v1094 = vpop.f32.mrb[0].mxu0
        %1095 = vmatprep.mubr.bf16.mxu0 %v844
        %1096 = vmatmul.mubr.bf16.gmra.mrb[0].mxu0 %v884
        %v1097 = vpop.f32.mrb[0].mxu0
        %v1098 = vadd.f32 0.0, %v1097
        %v1099 = vpop.f32.mrb[0].mxu0
        %v1100 = vpop.f32.mrb[0].mxu0
        %v1101 = vadd.f32 0.0, %v1100
        %v1102 = vpop.f32.mrb[0].mxu0
        %1103 = vmatprep.mubr.bf16.mxu0 %v845
        %1104 = vmatmul.mubr.bf16.gmra.mrb[0].mxu0 %v885
        %v1105 = vpop.f32.mrb[0].mxu0
        %v1106 = vadd.f32 0.0, %v1105
        %v1107 = vpop.f32.mrb[0].mxu0
        %v1108 = vpop.f32.mrb[0].mxu0
        %v1109 = vadd.f32 0.0, %v1108
        %v1110 = vpop.f32.mrb[0].mxu0
        %1111 = vmatprep.mubr.bf16.mxu0 %v846
        %1112 = vmatmul.mubr.bf16.gmra.mrb[0].mxu0 %v886
        %v1113 = vpop.f32.mrb[0].mxu0
        %v1114 = vadd.f32 0.0, %v1113
        %v1115 = vpop.f32.mrb[0].mxu0
        %v1116 = vpop.f32.mrb[0].mxu0
        %v1117 = vadd.f32 0.0, %v1116
        %v1118 = vpop.f32.mrb[0].mxu0
        %1119 = vdwg.mxu0
        %v1120 = vmax.f32 %v1058, 0.0
        %v1121 = vmax.f32 %v1061, 0.0
        %v1122 = vmax.f32 %v1066, 0.0
        %v1123 = vmax.f32 %v1069, 0.0
        %v1124 = vmax.f32 %v1074, 0.0
        %v1125 = vmax.f32 %v1077, 0.0
        %v1126 = vmax.f32 %v1082, 0.0
        %v1127 = vmax.f32 %v1085, 0.0
        %v1128 = vmax.f32 %v1090, 0.0
        %v1129 = vmax.f32 %v1093, 0.0
        %v1130 = vmax.f32 %v1098, 0.0
        %v1131 = vmax.f32 %v1101, 0.0
        %v1132 = vmax.f32 %v1106, 0.0
        %v1133 = vmax.f32 %v1109, 0.0
        %v1134 = vmax.f32 %v1114, 0.0
        %v1135 = vmax.f32 %v1117, 0.0
        %v1136 = vpack.c.bf16 %v1121, %v1120
        %v1137 = vpack.c.bf16 %v1123, %v1122
        %v1138 = vpack.c.bf16 %v1125, %v1124
        %v1139 = vpack.c.bf16 %v1127, %v1126
        %v1140 = vpack.c.bf16 %v1129, %v1128
        %v1141 = vpack.c.bf16 %v1131, %v1130
        %v1142 = vpack.c.bf16 %v1133, %v1132
        %v1143 = vpack.c.bf16 %v1135, %v1134
        %s1144 = sshra.s32 %s384, 4
        %s1145 = sand.u32 %s384, 15
        %s1146 = smul.addr %s1144, 8
        %s1147 = scalar_lea.vmem [#allocation2], %s1146
        %1148 = vst [vmem:[%s1147] sm:$0xff] %v1136
        %1149 = vst [vmem:[%s1147 + $0x8] sm:$0xff] %v1137
        %1150 = vst [vmem:[%s1147 + $0x10] sm:$0xff] %v1138
        %1151 = vst [vmem:[%s1147 + $0x18] sm:$0xff] %v1139
        %1152 = vst [vmem:[%s1147 + $0x20] sm:$0xff] %v1140
        %1153 = vst [vmem:[%s1147 + $0x28] sm:$0xff] %v1141
        %1154 = vst [vmem:[%s1147 + $0x30] sm:$0xff] %v1142
        %1155 = vst [vmem:[%s1147 + $0x38] sm:$0xff] %v1143
        %p1156 = scmp.eq.s32.totalorder %s24, 1
        // Predicated region
        $region73: #{tpu_custom_call.1} parent=55 // pred_check
          %p1157 = pneg %p1156
        $region74: #{tpu_custom_call.1} parent=55 // pred_check_branch
          %1159 = sbr.rel (%p1157) target = $region76
        $region75: #{tpu_custom_call.1} parent=55 // pred_region
          %v1160 = vld [vmem:[#allocation2] sm:$0xff]
          %v1161 = vld [vmem:[#allocation2 + $0x8] sm:$0xff]
          %v1162 = vld [vmem:[#allocation2 + $0x10] sm:$0xff]
          %v1163 = vld [vmem:[#allocation2 + $0x18] sm:$0xff]
          %v1164 = vld [vmem:[#allocation2 + $0x20] sm:$0xff]
          %v1165 = vld [vmem:[#allocation2 + $0x28] sm:$0xff]
          %v1166 = vld [vmem:[#allocation2 + $0x30] sm:$0xff]
          %v1167 = vld [vmem:[#allocation2 + $0x38] sm:$0xff]
          %v1168 = vld [vmem:[#allocation2 + $0x40] sm:$0xff]
          %v1169 = vld [vmem:[#allocation2 + $0x48] sm:$0xff]
          %v1170 = vld [vmem:[#allocation2 + $0x50] sm:$0xff]
          %v1171 = vld [vmem:[#allocation2 + $0x58] sm:$0xff]
          %v1172 = vld [vmem:[#allocation2 + $0x60] sm:$0xff]
          %v1173 = vld [vmem:[#allocation2 + $0x68] sm:$0xff]
          %v1174 = vld [vmem:[#allocation2 + $0x70] sm:$0xff]
          %v1175 = vld [vmem:[#allocation2 + $0x78] sm:$0xff]
          %v1176 = vld [vmem:[%s3] sm:$0xff]
          %v1177 = vld [vmem:[%s3 + $0x8] sm:$0xff]
          %v1180 = vunpack.c.l.b16 %v1176
          %v1181 = vunpack.c.h.b16 %v1176
          %v1182 = vunpack.c.l.b16 %v1177
          %v1183 = vunpack.c.h.b16 %v1177
          %v1184 = vpack.c.b16 %v1182, %v1180
          %v1185 = vpack.c.b16 %v1183, %v1181
          %1188 = vmatprep.subr.bf16.mxu0 0
          %1189 = vmatpush1.bf16.msra.mxu0 %v1160
          %1190 = vmatprep.subr.bf16.mxu0 0
          %1191 = vmatpush1.bf16.msra.mxu0 %v1161
          %1192 = vmatprep.subr.bf16.mxu0 0
          %1193 = vmatpush1.bf16.msra.mxu0 %v1162
          %1194 = vmatprep.subr.bf16.mxu0 0
          %1195 = vmatpush1.bf16.msra.mxu0 %v1163
          %1196 = vmatprep.subr.bf16.mxu0 0
          %1197 = vmatpush1.bf16.msra.mxu0 %v1164
          %1198 = vmatprep.subr.bf16.mxu0 0
          %1199 = vmatpush1.bf16.msra.mxu0 %v1165
          %1200 = vmatprep.subr.bf16.mxu0 0
          %1201 = vmatpush1.bf16.msra.mxu0 %v1166
          %1202 = vmatprep.subr.bf16.mxu0 0
          %1203 = vmatpush1.bf16.msra.mxu0 %v1167
          %1204 = vmatprep.subr.bf16.mxu0 0
          %1205 = vmatpush1.bf16.msra.mxu0 %v1168
          %1206 = vmatprep.subr.bf16.mxu0 0
          %1207 = vmatpush1.bf16.msra.mxu0 %v1169
          %1208 = vmatprep.subr.bf16.mxu0 0
          %1209 = vmatpush1.bf16.msra.mxu0 %v1170
          %1210 = vmatprep.subr.bf16.mxu0 0
          %1211 = vmatpush1.bf16.msra.mxu0 %v1171
          %1212 = vmatprep.subr.bf16.mxu0 0
          %1213 = vmatpush1.bf16.msra.mxu0 %v1172
          %1214 = vmatprep.subr.bf16.mxu0 0
          %1215 = vmatpush1.bf16.msra.mxu0 %v1173
          %1216 = vmatprep.subr.bf16.mxu0 0
          %1217 = vmatpush1.bf16.msra.mxu0 %v1174
          %1218 = vmatprep.subr.bf16.mxu0 0
          %1219 = vmatpush1.bf16.msra.mxu0 %v1175
          %1220 = vmatprep.mubr.bf16.mxu0 %v1185
          %1221 = vmatmul.mubr.bf16.gmra.mrb[0].mxu0 %v1184
          %v1222 = vpop.f32.mrb[0].mxu0
          %v1223 = vadd.f32 0.0, %v1222
          %v1224 = vpop.f32.mrb[0].mxu0
          %v1225 = vpop.f32.mrb[0].mxu0
          %v1226 = vadd.f32 0.0, %v1225
          %v1227 = vpop.f32.mrb[0].mxu0
          %1228 = vdwg.mxu0
          %v1229 = vld [vmem:[%s4] sm:$0xff]
          %v1230 = vld [vmem:[%s4 + $0x8] sm:$0xff]
          %v1233 = vunpack.c.l.b16 %v1229
          %v1234 = vunpack.c.h.b16 %v1229
          %v1235 = vunpack.c.l.b16 %v1230
          %v1236 = vunpack.c.h.b16 %v1230
          %v1237 = vpack.c.b16 %v1235, %v1233
          %v1238 = vpack.c.b16 %v1236, %v1234
          %1241 = vmatprep.subr.bf16.mxu0 0
          %1242 = vmatpush1.bf16.msra.mxu0 %v1160
          %1243 = vmatprep.subr.bf16.mxu0 0
          %1244 = vmatpush1.bf16.msra.mxu0 %v1161
          %1245 = vmatprep.subr.bf16.mxu0 0
          %1246 = vmatpush1.bf16.msra.mxu0 %v1162
          %1247 = vmatprep.subr.bf16.mxu0 0
          %1248 = vmatpush1.bf16.msra.mxu0 %v1163
          %1249 = vmatprep.subr.bf16.mxu0 0
          %1250 = vmatpush1.bf16.msra.mxu0 %v1164
          %1251 = vmatprep.subr.bf16.mxu0 0
          %1252 = vmatpush1.bf16.msra.mxu0 %v1165
          %1253 = vmatprep.subr.bf16.mxu0 0
          %1254 = vmatpush1.bf16.msra.mxu0 %v1166
          %1255 = vmatprep.subr.bf16.mxu0 0
          %1256 = vmatpush1.bf16.msra.mxu0 %v1167
          %1257 = vmatprep.subr.bf16.mxu0 0
          %1258 = vmatpush1.bf16.msra.mxu0 %v1168
          %1259 = vmatprep.subr.bf16.mxu0 0
          %1260 = vmatpush1.bf16.msra.mxu0 %v1169
          %1261 = vmatprep.subr.bf16.mxu0 0
          %1262 = vmatpush1.bf16.msra.mxu0 %v1170
          %1263 = vmatprep.subr.bf16.mxu0 0
          %1264 = vmatpush1.bf16.msra.mxu0 %v1171
          %1265 = vmatprep.subr.bf16.mxu0 0
          %1266 = vmatpush1.bf16.msra.mxu0 %v1172
          %1267 = vmatprep.subr.bf16.mxu0 0
          %1268 = vmatpush1.bf16.msra.mxu0 %v1173
          %1269 = vmatprep.subr.bf16.mxu0 0
          %1270 = vmatpush1.bf16.msra.mxu0 %v1174
          %1271 = vmatprep.subr.bf16.mxu0 0
          %1272 = vmatpush1.bf16.msra.mxu0 %v1175
          %1273 = vmatprep.mubr.bf16.mxu0 %v1238
          %1274 = vmatmul.mubr.bf16.gmra.mrb[0].mxu0 %v1237
          %v1275 = vpop.f32.mrb[0].mxu0
          %v1276 = vadd.f32 0.0, %v1275
          %v1277 = vpop.f32.mrb[0].mxu0
          %v1278 = vpop.f32.mrb[0].mxu0
          %v1279 = vadd.f32 0.0, %v1278
          %v1280 = vpop.f32.mrb[0].mxu0
          %1281 = vdwg.mxu0
          %v1282 = vld [vmem:[%s5] sm:$0xff]
          %v1283 = vld [vmem:[%s5 + $0x8] sm:$0xff]
          %1285 = vset.pattern.permute.xlu0 0
          %1286 = vperm.xlu0 %1285, %v1282
          %v1287 = vpop.permute.xlu0 %1286
          %1290 = vset.pattern.permute.xlu0 0
          %1291 = vperm.xlu0 %1290, %v1283
          %v1292 = vpop.permute.xlu0 %1291
          %v1294 = vmul.f32 %v1276, %v1287
          %v1295 = vmul.f32 %v1279, %v1292
          %v1296 = vpack.c.bf16 %v1226, %v1223
          %v1297 = vpack.c.bf16 %v1295, %v1294
          %v1298 = vld [vmem:[#allocation8] sm:$0xf]
          %v1299 = vld [vmem:[#allocation8 + $0x4] sm:$0xf]
          %v1300 = vld [vmem:[#allocation8 + $0x8] sm:$0xf]
          %v1301 = vld [vmem:[#allocation8 + $0xc] sm:$0xf]
          %v1302 = vld [vmem:[#allocation8 + $0x10] sm:$0xf]
          %v1303 = vld [vmem:[#allocation8 + $0x14] sm:$0xf]
          %v1304 = vld [vmem:[#allocation8 + $0x18] sm:$0xf]
          %v1305 = vld [vmem:[#allocation8 + $0x1c] sm:$0xf]
          %v1306 = vld [vmem:[#allocation8 + $0x20] sm:$0xf]
          %v1307 = vld [vmem:[#allocation8 + $0x24] sm:$0xf]
          %v1308 = vld [vmem:[#allocation8 + $0x28] sm:$0xf]
          %v1309 = vld [vmem:[#allocation8 + $0x2c] sm:$0xf]
          %v1310 = vld [vmem:[#allocation8 + $0x30] sm:$0xf]
          %v1311 = vld [vmem:[#allocation8 + $0x34] sm:$0xf]
          %v1312 = vld [vmem:[#allocation8 + $0x38] sm:$0xf]
          %v1313 = vld [vmem:[#allocation8 + $0x3c] sm:$0xf]
          %v1314 = vld [vmem:[#allocation8 + $0x40] sm:$0xf]
          %v1315 = vld [vmem:[#allocation8 + $0x44] sm:$0xf]
          %v1316 = vld [vmem:[#allocation8 + $0x48] sm:$0xf]
          %v1317 = vld [vmem:[#allocation8 + $0x4c] sm:$0xf]
          %v1318 = vld [vmem:[#allocation8 + $0x50] sm:$0xf]
          %v1319 = vld [vmem:[#allocation8 + $0x54] sm:$0xf]
          %v1320 = vld [vmem:[#allocation8 + $0x58] sm:$0xf]
          %v1321 = vld [vmem:[#allocation8 + $0x5c] sm:$0xf]
          %v1322 = vld [vmem:[#allocation8 + $0x60] sm:$0xf]
          %v1323 = vld [vmem:[#allocation8 + $0x64] sm:$0xf]
          %v1324 = vld [vmem:[#allocation8 + $0x68] sm:$0xf]
          %v1325 = vld [vmem:[#allocation8 + $0x6c] sm:$0xf]
          %v1326 = vld [vmem:[#allocation8 + $0x70] sm:$0xf]
          %v1327 = vld [vmem:[#allocation8 + $0x74] sm:$0xf]
          %v1328 = vld [vmem:[#allocation8 + $0x78] sm:$0xf]
          %v1329 = vld [vmem:[#allocation8 + $0x7c] sm:$0xf]
          %v1362 = vunpack.c.l.b16 %v1298
          %v1363 = vunpack.c.l.b16 %v1299
          %v1364 = vunpack.c.l.b16 %v1300
          %v1365 = vunpack.c.l.b16 %v1301
          %v1366 = vunpack.c.l.b16 %v1302
          %v1367 = vunpack.c.l.b16 %v1303
          %v1368 = vunpack.c.l.b16 %v1304
          %v1369 = vunpack.c.l.b16 %v1305
          %v1370 = vunpack.c.l.b16 %v1306
          %v1371 = vunpack.c.l.b16 %v1307
          %v1372 = vunpack.c.l.b16 %v1308
          %v1373 = vunpack.c.l.b16 %v1309
          %v1374 = vunpack.c.l.b16 %v1310
          %v1375 = vunpack.c.l.b16 %v1311
          %v1376 = vunpack.c.l.b16 %v1312
          %v1377 = vunpack.c.l.b16 %v1313
          %v1378 = vunpack.c.l.b16 %v1314
          %v1379 = vunpack.c.l.b16 %v1315
          %v1380 = vunpack.c.l.b16 %v1316
          %v1381 = vunpack.c.l.b16 %v1317
          %v1382 = vunpack.c.l.b16 %v1318
          %v1383 = vunpack.c.l.b16 %v1319
          %v1384 = vunpack.c.l.b16 %v1320
          %v1385 = vunpack.c.l.b16 %v1321
          %v1386 = vunpack.c.l.b16 %v1322
          %v1387 = vunpack.c.l.b16 %v1323
          %v1388 = vunpack.c.l.b16 %v1324
          %v1389 = vunpack.c.l.b16 %v1325
          %v1390 = vunpack.c.l.b16 %v1326
          %v1391 = vunpack.c.l.b16 %v1327
          %v1392 = vunpack.c.l.b16 %v1328
          %v1393 = vunpack.c.l.b16 %v1329
          %v1394 = vpack.c.b16 %v1363, %v1362
          %v1395 = vpack.c.b16 %v1365, %v1364
          %v1396 = vpack.c.b16 %v1367, %v1366
          %v1397 = vpack.c.b16 %v1369, %v1368
          %v1398 = vpack.c.b16 %v1371, %v1370
          %v1399 = vpack.c.b16 %v1373, %v1372
          %v1400 = vpack.c.b16 %v1375, %v1374
          %v1401 = vpack.c.b16 %v1377, %v1376
          %v1402 = vpack.c.b16 %v1379, %v1378
          %v1403 = vpack.c.b16 %v1381, %v1380
          %v1404 = vpack.c.b16 %v1383, %v1382
          %v1405 = vpack.c.b16 %v1385, %v1384
          %v1406 = vpack.c.b16 %v1387, %v1386
          %v1407 = vpack.c.b16 %v1389, %v1388
          %v1408 = vpack.c.b16 %v1391, %v1390
          %v1409 = vpack.c.b16 %v1393, %v1392
          %1426 = vmatprep.subr.bf16.mxu0 0
          %1427 = vmatpush1.bf16.msra.mxu0 %v1394
          %1428 = vmatprep.subr.bf16.mxu0 0
          %1429 = vmatpush1.bf16.msra.mxu0 %v1395
          %1430 = vmatprep.subr.bf16.mxu0 0
          %1431 = vmatpush1.bf16.msra.mxu0 %v1396
          %1432 = vmatprep.subr.bf16.mxu0 0
          %1433 = vmatpush1.bf16.msra.mxu0 %v1397
          %1434 = vmatprep.subr.bf16.mxu0 0
          %1435 = vmatpush1.bf16.msra.mxu0 %v1398
          %1436 = vmatprep.subr.bf16.mxu0 0
          %1437 = vmatpush1.bf16.msra.mxu0 %v1399
          %1438 = vmatprep.subr.bf16.mxu0 0
          %1439 = vmatpush1.bf16.msra.mxu0 %v1400
          %1440 = vmatprep.subr.bf16.mxu0 0
          %1441 = vmatpush1.bf16.msra.mxu0 %v1401
          %1442 = vmatprep.subr.bf16.mxu0 0
          %1443 = vmatpush1.bf16.msra.mxu0 %v1402
          %1444 = vmatprep.subr.bf16.mxu0 0
          %1445 = vmatpush1.bf16.msra.mxu0 %v1403
          %1446 = vmatprep.subr.bf16.mxu0 0
          %1447 = vmatpush1.bf16.msra.mxu0 %v1404
          %1448 = vmatprep.subr.bf16.mxu0 0
          %1449 = vmatpush1.bf16.msra.mxu0 %v1405
          %1450 = vmatprep.subr.bf16.mxu0 0
          %1451 = vmatpush1.bf16.msra.mxu0 %v1406
          %1452 = vmatprep.subr.bf16.mxu0 0
          %1453 = vmatpush1.bf16.msra.mxu0 %v1407
          %1454 = vmatprep.subr.bf16.mxu0 0
          %1455 = vmatpush1.bf16.msra.mxu0 %v1408
          %1456 = vmatprep.subr.bf16.mxu0 0
          %1457 = vmatpush1.bf16.msra.mxu0 %v1409
          %1458 = vmatprep.mubr.bf16.mxu0 %v1297
          %1459 = vmatmul.mubr.bf16.gmra.mrb[0].mxu0 %v1296
          %v1460 = vpop.f32.mrb[0].mxu0
          %v1461 = vadd.f32 0.0, %v1460
          %v1462 = vpop.f32.mrb[0].mxu0
          %v1463 = vpop.f32.mrb[0].mxu0
          %v1464 = vadd.f32 0.0, %v1463
          %v1465 = vpop.f32.mrb[0].mxu0
          %1466 = vdwg.mxu0
          %v1467 = vmax.f32 %v1461, 0.0
          %v1468 = vmax.f32 %v1464, 0.0
          %v1469 = vpack.c.bf16 %v1468, %v1467
          %v1470 = vld [vmem:[#allocation9] sm:$0xf]
          %v1471 = vld [vmem:[#allocation9 + $0x4] sm:$0xf]
          %v1472 = vld [vmem:[#allocation9 + $0x8] sm:$0xf]
          %v1473 = vld [vmem:[#allocation9 + $0xc] sm:$0xf]
          %v1474 = vld [vmem:[#allocation9 + $0x10] sm:$0xf]
          %v1475 = vld [vmem:[#allocation9 + $0x14] sm:$0xf]
          %v1476 = vld [vmem:[#allocation9 + $0x18] sm:$0xf]
          %v1477 = vld [vmem:[#allocation9 + $0x1c] sm:$0xf]
          %v1478 = vld [vmem:[#allocation9 + $0x20] sm:$0xf]
          %v1479 = vld [vmem:[#allocation9 + $0x24] sm:$0xf]
          %v1480 = vld [vmem:[#allocation9 + $0x28] sm:$0xf]
          %v1481 = vld [vmem:[#allocation9 + $0x2c] sm:$0xf]
          %v1482 = vld [vmem:[#allocation9 + $0x30] sm:$0xf]
          %v1483 = vld [vmem:[#allocation9 + $0x34] sm:$0xf]
          %v1484 = vld [vmem:[#allocation9 + $0x38] sm:$0xf]
          %v1485 = vld [vmem:[#allocation9 + $0x3c] sm:$0xf]
          %v1502 = vunpack.c.l.b16 %v1470
          %v1503 = vunpack.c.l.b16 %v1471
          %v1504 = vunpack.c.l.b16 %v1472
          %v1505 = vunpack.c.l.b16 %v1473
          %v1506 = vunpack.c.l.b16 %v1474
          %v1507 = vunpack.c.l.b16 %v1475
          %v1508 = vunpack.c.l.b16 %v1476
          %v1509 = vunpack.c.l.b16 %v1477
          %v1510 = vunpack.c.l.b16 %v1478
          %v1511 = vunpack.c.l.b16 %v1479
          %v1512 = vunpack.c.l.b16 %v1480
          %v1513 = vunpack.c.l.b16 %v1481
          %v1514 = vunpack.c.l.b16 %v1482
          %v1515 = vunpack.c.l.b16 %v1483
          %v1516 = vunpack.c.l.b16 %v1484
          %v1517 = vunpack.c.l.b16 %v1485
          %v1518 = vpack.c.b16 %v1503, %v1502
          %v1519 = vpack.c.b16 %v1505, %v1504
          %v1520 = vpack.c.b16 %v1507, %v1506
          %v1521 = vpack.c.b16 %v1509, %v1508
          %v1522 = vpack.c.b16 %v1511, %v1510
          %v1523 = vpack.c.b16 %v1513, %v1512
          %v1524 = vpack.c.b16 %v1515, %v1514
          %v1525 = vpack.c.b16 %v1517, %v1516
          %1534 = vmatprep.subr.bf16.mxu0 0
          %1535 = vmatpush1.bf16.msra.mxu0 %v1518
          %1536 = vmatprep.subr.bf16.mxu0 0
          %1537 = vmatpush1.bf16.msra.mxu0 %v1519
          %1538 = vmatprep.subr.bf16.mxu0 0
          %1539 = vmatpush1.bf16.msra.mxu0 %v1520
          %1540 = vmatprep.subr.bf16.mxu0 0
          %1541 = vmatpush1.bf16.msra.mxu0 %v1521
          %1542 = vmatprep.subr.bf16.mxu0 0
          %1543 = vmatpush1.bf16.msra.mxu0 %v1522
          %1544 = vmatprep.subr.bf16.mxu0 0
          %1545 = vmatpush1.bf16.msra.mxu0 %v1523
          %1546 = vmatprep.subr.bf16.mxu0 0
          %1547 = vmatpush1.bf16.msra.mxu0 %v1524
          %1548 = vmatprep.subr.bf16.mxu0 0
          %1549 = vmatpush1.bf16.msra.mxu0 %v1525
          %1550 = vmatprep.subr.bf16.mxu0 0
          %1551 = vmatpush1.bf16.msra.mxu0 0
          %1552 = vmatprep.subr.bf16.mxu0 0
          %1553 = vmatpush1.bf16.msra.mxu0 0
          %1554 = vmatprep.subr.bf16.mxu0 0
          %1555 = vmatpush1.bf16.msra.mxu0 0
          %1556 = vmatprep.subr.bf16.mxu0 0
          %1557 = vmatpush1.bf16.msra.mxu0 0
          %1558 = vmatprep.subr.bf16.mxu0 0
          %1559 = vmatpush1.bf16.msra.mxu0 0
          %1560 = vmatprep.subr.bf16.mxu0 0
          %1561 = vmatpush1.bf16.msra.mxu0 0
          %1562 = vmatprep.subr.bf16.mxu0 0
          %1563 = vmatpush1.bf16.msra.mxu0 0
          %1564 = vmatprep.subr.bf16.mxu0 0
          %1565 = vmatpush1.bf16.msra.mxu0 0
          %1566 = vmatprep.mubr.bf16.mxu0 0
          %1567 = vmatmul.mubr.bf16.gmra.mrb[0].mxu0 %v1469
          %v1568 = vpop.f32.mrb[0].mxu0
          %v1569 = vadd.f32 0.0, %v1568
          %v1570 = vpop.f32.mrb[0].mxu0
          %v1571 = vpop.f32.mrb[0].mxu0
          %v1572 = vadd.f32 0.0, %v1571
          %v1573 = vpop.f32.mrb[0].mxu0
          %1574 = vdwg.mxu0
          %1575 = vst [vmem:[#allocation11] sm:$0xff] %v1569
          %1576 = vst [vmem:[#allocation11 + $0x8] sm:$0xff] %v1572
        $region76: #{tpu_custom_call.1} parent=55 // pred_fallthru
          _
        // Predicated region
        $region77: #{tpu_custom_call.1} parent=55 // pred_check
          %p1577 = pneg %p231
        $region78: #{tpu_custom_call.1} parent=55 // pred_check_branch
          %1579 = sbr.rel (%p1577) target = $region80
        $region79: #{tpu_custom_call.1} parent=55 // pred_region
          %s1581 = ssub.s32 256, 256
          %1582 = vsyncadd [#allocation5], %s1581
          %s1583 = sshll.u32 [#allocation11], 4
          %s1584 = int_to_ptr.vmem [resolvable:$true] %s1583
          %1589 = dma.vmem_to_hbm [thread:$0]  %s1584, 256, %s9, [#allocation5], 128, 128, 8
        $region80: #{tpu_custom_call.1} parent=55 // pred_fallthru
          _
        // Predicated region
        $region81: #{tpu_custom_call.1} parent=55 // pred_check
          %p1590 = pneg %p231
        $region82: #{tpu_custom_call.1} parent=55 // pred_check_branch
          %1592 = sbr.rel (%p1590) target = $region84
        $region83: #{tpu_custom_call.1} parent=55 // pred_region
          %1593 = dma.done [#allocation5], 256
        $region84: #{tpu_custom_call.1} parent=55 // pred_fallthru
          _
      $region56: #{tpu_custom_call.1} parent=5 // pred_fallthru
        _
      %p1594 = scmp.le.s32.totalorder 2, %s19
      // Predicated region
      $region85: #{tpu_custom_call.1} parent=5 // pred_check
        %p1595 = pneg %p1594
      $region86: #{tpu_custom_call.1} parent=5 // pred_check_branch
        %1597 = sbr.rel (%p1595) target = $region88
      $region87: #{tpu_custom_call.1} parent=5 // pred_region
        %s1598 = ssub.s32 %s19, 2
      $region88: #{tpu_custom_call.1} parent=5 // pred_fallthru
        _
    $region6: #{tpu_custom_call.1} parent=1 // loop_footer
      %s23 = sadd.s32 1, %s19
    $region7: #{tpu_custom_call.1} parent=1 // loop_footer_branch
      %18 = sbr.rel target = $region3
    $region8: #{tpu_custom_call.1} parent=1 // loop_exit
      _
    %1599 = vsyncpa [#allocation4], 1
    %s1600 = scalar_lea.sflag [#allocation4], 1
    %1601 = vsyncpa %s1600, 1
    %1602 = vsyncpa [#allocation7], 1
    %1603 = vsyncpa [#allocation10], 1
    %1604 = vsyncpa [#allocation5], 1
    %s1605 = scalar_lea.sflag [#allocation5], 1
    %1606 = vsyncpa %s1605, 1

</llo_original>
